<compile_context>
chip_gen: v7x
topology: tpu7x:2x2x1
jax: 0.10.0
libtpu: 0.0.40
codegen_flags: <defaults>
</compile_context>

<pallas_src>
import functools

import jax
import jax.numpy as jnp
from jax.experimental import pallas as pl
from jax.experimental.pallas import tpu as pltpu


def _round_up(v: int, m: int) -> int:
    return (v + m - 1) // m * m


# ---------------------------------------------------------------------------
# 3x3 same-padding convolution (one image per grid step).
# ---------------------------------------------------------------------------

def _conv3x3_kernel(x_ref, w_ref, b_ref, o_ref, *, tap_offsets, apply_relu):
    # x_ref: (1, Ci, L_in)  zero-padded image, spatial dims flattened to lanes
    # w_ref: (9, Co, Ci)    taps in (dy, dx) row-major order
    # b_ref: (Co, 1)
    # o_ref: (1, Co, La)    La = round_up(H * (W + 2), 128): lane-dense output
    la = o_ref.shape[-1]
    acc = jnp.zeros(o_ref.shape[1:], jnp.float32)
    for t, off in enumerate(tap_offsets):          # static 9-tap unroll
        xs = x_ref[0, :, pl.ds(off, la)]           # (Ci, La), static offset
        acc = acc + jnp.dot(w_ref[t], xs, preferred_element_type=jnp.float32)
    acc = acc + b_ref[...]                         # (Co, 1) broadcast
    if apply_relu:
        acc = jnp.maximum(acc, 0.0)
    o_ref[0] = acc.astype(o_ref.dtype)


def _conv3x3(x, w, b, *, apply_relu):
    """3x3, stride-1, pad-1 conv.  x: (N,Ci,H,W), w: (Co,Ci,3,3), b: (Co,)."""
    n, ci, h, wdim = x.shape
    co = w.shape[0]
    wp = wdim + 2                                  # padded row length
    la = _round_up(h * wp, 128)                    # lane-dense output length
    # Every length-`la` slice starting at a tap offset (max 2*wp + 2) must be
    # in bounds, so pad the flattened input out to at least that length.
    l_in = _round_up(max((h + 2) * wp, la + 2 * wp + 2), 128)

    xp = jnp.pad(x, ((0, 0), (0, 0), (1, 1), (1, 1)))          # (N,Ci,H+2,Wp)
    xf = xp.reshape(n, ci, (h + 2) * wp)
    xf = jnp.pad(xf, ((0, 0), (0, 0), (0, l_in - (h + 2) * wp)))

    w9 = jnp.transpose(w, (2, 3, 0, 1)).reshape(9, co, ci)     # (dy,dx) taps
    b2d = b.reshape(co, 1)
    taps = tuple(dy * wp + dx for dy in range(3) for dx in range(3))

    # NOTE: one whole image per grid step keeps this pass simple; for very
    # large spatial extents it would additionally be row-tiled.  The
    # bandwidth-dominant CA passes below are fully spatially tiled.
    out_flat = pl.pallas_call(
        functools.partial(_conv3x3_kernel, tap_offsets=taps,
                          apply_relu=apply_relu),
        out_shape=jax.ShapeDtypeStruct((n, co, la), x.dtype),
        grid=(n,),
        in_specs=[
            pl.BlockSpec((1, ci, l_in), lambda i: (i, 0, 0)),
            pl.BlockSpec((9, co, ci), lambda i: (0, 0, 0)),
            pl.BlockSpec((co, 1), lambda i: (0, 0)),
        ],
        out_specs=pl.BlockSpec((1, co, la), lambda i: (i, 0, 0)),
        compiler_params=pltpu.CompilerParams(
            dimension_semantics=("parallel",)),
    )(xf, w9, b2d)

    # Drop padded lanes: flat index j = row*Wp + col, valid col in [0, W).
    return out_flat[:, :, : h * wp].reshape(n, co, h, wp)[:, :, :, :wdim]


# ---------------------------------------------------------------------------
# CALayer (global avg pool -> 1x1 conv -> ReLU -> 1x1 conv -> sigmoid),
# then per-channel scale fused with RCAB's residual add.
# ---------------------------------------------------------------------------

def _ca_pool_kernel(h_ref, w1_ref, b1_ref, w2_ref, b2_ref, y_ref, acc_ref, *,
                    inv_hw):
    # h_ref : (1, C, T_HW) spatial tile      w1_ref: (Cr, C)   b1_ref: (Cr, 1)
    # y_ref : (1, C, 1) resident output      w2_ref: (C, Cr)   b2_ref: (C, 1)
    # acc_ref: (C, 1) f32 scratch holding partial spatial sums
    t = pl.program_id(1)

    @pl.when(t == 0)
    def _():
        acc_ref[...] = jnp.zeros_like(acc_ref)

    # Partial sum for this tile, accumulated in f32 without materialising an
    # f32 copy of the whole tile (zero-padded lanes contribute nothing).
    acc_ref[...] += jnp.sum(h_ref[0], axis=-1, keepdims=True,
                            dtype=jnp.float32)

    @pl.when(t == pl.num_programs(1) - 1)
    def _():
        # The FC is ~2*C*Cr flops -- noise next to the HBM streaming cost --
        # so plain column-layout MXU dots are fine here (no relayouts).
        pooled = acc_ref[...] * inv_hw                               # (C, 1)
        hid = jnp.dot(w1_ref[...], pooled,
                      preferred_element_type=jnp.float32) + b1_ref[...]
        hid = jnp.maximum(hid, 0.0)                                  # (Cr, 1)
        z = jnp.dot(w2_ref[...], hid,
                    preferred_element_type=jnp.float32) + b2_ref[...]
        y_ref[0] = jax.nn.sigmoid(z).astype(y_ref.dtype)             # (C, 1)


def _ca_scale_residual_kernel(h_ref, y_ref, x_ref, o_ref):
    # out = h * y + x : channel scale broadcast over the lane-dense spatial
    # tile, fused with the residual add.  Pure VPU work, unmasked stores.
    o_ref[0] = (h_ref[0] * y_ref[0] + x_ref[0]).astype(o_ref.dtype)


def _ca_residual(h, x, w1, b1, w2, b2, *, vmem_tile_budget=8 * 1024 * 1024):
    """Returns h * CALayer(h) + x.  h, x: (N, C, H, W)."""
    n, c, hh, ww = h.shape
    hw = hh * ww
    cr = w1.shape[0]

    # Spatial tile: a multiple of 128 lanes, sized so the scale pass's
    # double-buffered blocks (h, x, out -> ~8 * C * T_HW * 4 bytes) stay well
    # inside every generation's default scoped-VMEM budget (16 MiB v5e,
    # 32 MiB v6e/v7x, v7x physical = 64 MiB), while staying large enough to
    # amortise the ~0.35 us per-step overhead.
    t_hw = max(128, vmem_tile_budget // (8 * c * 4) // 128 * 128)
    t_hw = min(t_hw, _round_up(hw, 128))
    hw_pad = _round_up(hw, t_hw)
    n_t = hw_pad // t_hw

    def _flat(a):
        a = a.reshape(n, c, hw)
        return jnp.pad(a, ((0, 0), (0, 0), (0, hw_pad - hw)))

    h_f = _flat(h)
    x_f = _flat(x)
    w1c = jnp.asarray(w1, jnp.float32)                   # (Cr, C) un-transposed
    w2c = jnp.asarray(w2, jnp.float32)                   # (C, Cr)
    b1c = jnp.asarray(b1, jnp.float32).reshape(cr, 1)    # column layout
    b2c = jnp.asarray(b2, jnp.float32).reshape(c, 1)

    # Pass 1: pooled mean + tiny FC -> per-(image, channel) scale (N, C, 1).
    y = pl.pallas_call(
        functools.partial(_ca_pool_kernel, inv_hw=1.0 / hw),
        out_shape=jax.ShapeDtypeStruct((n, c, 1), jnp.float32),
        grid=(n, n_t),
        in_specs=[
            pl.BlockSpec((1, c, t_hw), lambda i, t: (i, 0, t)),
            pl.BlockSpec((cr, c), lambda i, t: (0, 0)),
            pl.BlockSpec((cr, 1), lambda i, t: (0, 0)),
            pl.BlockSpec((c, cr), lambda i, t: (0, 0)),
            pl.BlockSpec((c, 1), lambda i, t: (0, 0)),
        ],
        out_specs=pl.BlockSpec((1, c, 1), lambda i, t: (i, 0, 0)),
        scratch_shapes=[pltpu.VMEM((c, 1), jnp.float32)],
        compiler_params=pltpu.CompilerParams(
            dimension_semantics=("parallel", "arbitrary")),
    )(h_f, w1c, b1c, w2c, b2c)

    # Pass 2: lane-dense scale + residual; both grid axes parallel so v7x's
    # two TensorCores are fed even at batch 1-2.
    out_f = pl.pallas_call(
        _ca_scale_residual_kernel,
        out_shape=jax.ShapeDtypeStruct((n, c, hw_pad), h.dtype),
        grid=(n, n_t),
        in_specs=[
            pl.BlockSpec((1, c, t_hw), lambda i, t: (i, 0, t)),
            pl.BlockSpec((1, c, 1), lambda i, t: (i, 0, 0)),
            pl.BlockSpec((1, c, t_hw), lambda i, t: (i, 0, t)),
        ],
        out_specs=pl.BlockSpec((1, c, t_hw), lambda i, t: (i, 0, t)),
        compiler_params=pltpu.CompilerParams(
            dimension_semantics=("parallel", "parallel")),
    )(h_f, y, x_f)

    return out_f[:, :, :hw].reshape(n, c, hh, ww)


# ---------------------------------------------------------------------------
# Full RCAB forward.
# ---------------------------------------------------------------------------

def rcab(x, wc1, bc1, wc2, bc2, w1, b1, w2, b2):
    """RCAB: conv3x3 -> ReLU -> conv3x3 -> CALayer scale -> + x."""
    h = _conv3x3(x, wc1, bc1, apply_relu=True)
    h = _conv3x3(h, wc2, bc2, apply_relu=False)
    return _ca_residual(h, x, w1, b1, w2, b2)


def _reference_rcab(x, wc1, bc1, wc2, bc2, w1, b1, w2, b2):
    # Pure-JAX reference of the PyTorch RCAB forward (sanity check only).
    hp = jax.lax.Precision.HIGHEST

    def conv3(a, w, b):
        y = jax.lax.conv_general_dilated(
            a, w, window_strides=(1, 1), padding="SAME",
            dimension_numbers=("NCHW", "OIHW", "NCHW"), precision=hp)
        return y + b[None, :, None, None]

    h = jnp.maximum(conv3(x, wc1, bc1), 0.0)
    h = conv3(h, wc2, bc2)
    y = jnp.mean(h, axis=(2, 3), keepdims=True)
    y = jnp.einsum("oc,nchw->nohw", w1, y, precision=hp) + b1[None, :, None, None]
    y = jnp.maximum(y, 0.0)
    y = jnp.einsum("oc,nchw->nohw", w2, y, precision=hp) + b2[None, :, None, None]
    y = jax.nn.sigmoid(y)
    return h * y + x


if __name__ == "__main__":
    # RCAB config: n_feat=32, kernel_size=3, reduction=16 (hidden = 2).
    n, c, hh, ww = 2, 32, 16, 16
    reduction = 16
    cr = c // reduction

    key = jax.random.PRNGKey(0)
    keys = jax.random.split(key, 9)

    x = jax.random.normal(keys[0], (n, c, hh, ww), dtype=jnp.float32)
    wc1 = jax.random.normal(keys[1], (c, c, 3, 3), dtype=jnp.float32) * 0.05
    bc1 = jax.random.normal(keys[2], (c,), dtype=jnp.float32) * 0.05
    wc2 = jax.random.normal(keys[3], (c, c, 3, 3), dtype=jnp.float32) * 0.05
    bc2 = jax.random.normal(keys[4], (c,), dtype=jnp.float32) * 0.05
    w1 = jax.random.normal(keys[5], (cr, c), dtype=jnp.float32) * 0.1
    b1 = jax.random.normal(keys[6], (cr,), dtype=jnp.float32) * 0.1
    w2 = jax.random.normal(keys[7], (c, cr), dtype=jnp.float32) * 0.1
    b2 = jax.random.normal(keys[8], (c,), dtype=jnp.float32) * 0.1

    out = rcab(x, wc1, bc1, wc2, bc2, w1, b1, w2, b2)
    out = jax.block_until_ready(out)

    ref = _reference_rcab(x, wc1, bc1, wc2, bc2, w1, b1, w2, b2)
    assert out.shape == (n, c, hh, ww)
    # In-kernel f32 matmuls run at the MXU's default f32 precision (bf16
    # passes on some generations), hence the modest tolerance.
    err = jnp.max(jnp.abs(out - ref))
    assert jnp.allclose(out, ref, atol=1e-2, rtol=1e-2), f"mismatch: {err}"
    print("KERNEL_OK")
</pallas_src>

<mosaic_0001>
module attributes {stable_mosaic.version = 11 : i64} {
  func.func @_conv3x3_kernel(%arg0: i32, %arg1: memref<1x32x512xf32, #tpu.memory_space<vmem>>, %arg2: memref<9x32x32xf32, #tpu.memory_space<vmem>>, %arg3: memref<32x1xf32, #tpu.memory_space<vmem>>, %arg4: memref<1x32x384xf32, #tpu.memory_space<vmem>>) attributes {dimension_semantics = [#tpu.dimension_semantics<parallel>], iteration_bounds = array<i64: 2>, scalar_prefetch = 0 : i64, scratch_operands = 0 : i64, tpu.core_type = #tpu.core_type<tc>, window_params = [{transform_indices = @transform_0, window_bounds = array<i64: 1, 32, 512>}, {pipeline_mode = #tpu.pipeline_mode<synchronous>, transform_indices = @transform_1, window_bounds = array<i64: 9, 32, 32>}, {pipeline_mode = #tpu.pipeline_mode<synchronous>, transform_indices = @transform_2, window_bounds = array<i64: 32, 1>}, {transform_indices = @transform_3, window_bounds = array<i64: 1, 32, 384>}]} {
    %cst = arith.constant 0.000000e+00 : f32
    %0 = vector.broadcast %cst : f32 to vector<32x384xf32>
    %c0 = arith.constant 0 : index
    %c0_0 = arith.constant 0 : index
    %c0_1 = arith.constant 0 : index
    %1 = vector.load %arg1[%c0, %c0_0, %c0_1] : memref<1x32x512xf32, #tpu.memory_space<vmem>>, vector<1x32x384xf32>
    %2 = vector.shape_cast %1 : vector<1x32x384xf32> to vector<32x384xf32>
    %c0_2 = arith.constant 0 : index
    %c0_3 = arith.constant 0 : index
    %c0_4 = arith.constant 0 : index
    %3 = vector.load %arg2[%c0_2, %c0_3, %c0_4] : memref<9x32x32xf32, #tpu.memory_space<vmem>>, vector<1x32x32xf32>
    %4 = vector.shape_cast %3 : vector<1x32x32xf32> to vector<32x32xf32>
    %cst_5 = arith.constant dense<0.000000e+00> : vector<32x384xf32>
    %5 = tpu.matmul %4, %2, %cst_5 {dimension_numbers = #tpu.dot_dimension_numbers<[1], [0], [0], [1], [0, 0, 1, 1], [], []>} : vector<32x32xf32>, vector<32x384xf32>, vector<32x384xf32> -> vector<32x384xf32>
    %6 = arith.addf %0, %5 : vector<32x384xf32>
    %c0_6 = arith.constant 0 : index
    %c0_7 = arith.constant 0 : index
    %c1 = arith.constant 1 : index
    %7 = vector.load %arg1[%c0_6, %c0_7, %c1] : memref<1x32x512xf32, #tpu.memory_space<vmem>>, vector<1x32x384xf32>
    %8 = vector.shape_cast %7 : vector<1x32x384xf32> to vector<32x384xf32>
    %c1_8 = arith.constant 1 : index
    %c0_9 = arith.constant 0 : index
    %c0_10 = arith.constant 0 : index
    %9 = vector.load %arg2[%c1_8, %c0_9, %c0_10] : memref<9x32x32xf32, #tpu.memory_space<vmem>>, vector<1x32x32xf32>
    %10 = vector.shape_cast %9 : vector<1x32x32xf32> to vector<32x32xf32>
    %cst_11 = arith.constant dense<0.000000e+00> : vector<32x384xf32>
    %11 = tpu.matmul %10, %8, %cst_11 {dimension_numbers = #tpu.dot_dimension_numbers<[1], [0], [0], [1], [0, 0, 1, 1], [], []>} : vector<32x32xf32>, vector<32x384xf32>, vector<32x384xf32> -> vector<32x384xf32>
    %12 = arith.addf %6, %11 : vector<32x384xf32>
    %c0_12 = arith.constant 0 : index
    %c0_13 = arith.constant 0 : index
    %c2 = arith.constant 2 : index
    %13 = vector.load %arg1[%c0_12, %c0_13, %c2] : memref<1x32x512xf32, #tpu.memory_space<vmem>>, vector<1x32x384xf32>
    %14 = vector.shape_cast %13 : vector<1x32x384xf32> to vector<32x384xf32>
    %c2_14 = arith.constant 2 : index
    %c0_15 = arith.constant 0 : index
    %c0_16 = arith.constant 0 : index
    %15 = vector.load %arg2[%c2_14, %c0_15, %c0_16] : memref<9x32x32xf32, #tpu.memory_space<vmem>>, vector<1x32x32xf32>
    %16 = vector.shape_cast %15 : vector<1x32x32xf32> to vector<32x32xf32>
    %cst_17 = arith.constant dense<0.000000e+00> : vector<32x384xf32>
    %17 = tpu.matmul %16, %14, %cst_17 {dimension_numbers = #tpu.dot_dimension_numbers<[1], [0], [0], [1], [0, 0, 1, 1], [], []>} : vector<32x32xf32>, vector<32x384xf32>, vector<32x384xf32> -> vector<32x384xf32>
    %18 = arith.addf %12, %17 : vector<32x384xf32>
    %c0_18 = arith.constant 0 : index
    %c0_19 = arith.constant 0 : index
    %c18 = arith.constant 18 : index
    %19 = vector.load %arg1[%c0_18, %c0_19, %c18] : memref<1x32x512xf32, #tpu.memory_space<vmem>>, vector<1x32x384xf32>
    %20 = vector.shape_cast %19 : vector<1x32x384xf32> to vector<32x384xf32>
    %c3 = arith.constant 3 : index
    %c0_20 = arith.constant 0 : index
    %c0_21 = arith.constant 0 : index
    %21 = vector.load %arg2[%c3, %c0_20, %c0_21] : memref<9x32x32xf32, #tpu.memory_space<vmem>>, vector<1x32x32xf32>
    %22 = vector.shape_cast %21 : vector<1x32x32xf32> to vector<32x32xf32>
    %cst_22 = arith.constant dense<0.000000e+00> : vector<32x384xf32>
    %23 = tpu.matmul %22, %20, %cst_22 {dimension_numbers = #tpu.dot_dimension_numbers<[1], [0], [0], [1], [0, 0, 1, 1], [], []>} : vector<32x32xf32>, vector<32x384xf32>, vector<32x384xf32> -> vector<32x384xf32>
    %24 = arith.addf %18, %23 : vector<32x384xf32>
    %c0_23 = arith.constant 0 : index
    %c0_24 = arith.constant 0 : index
    %c19 = arith.constant 19 : index
    %25 = vector.load %arg1[%c0_23, %c0_24, %c19] : memref<1x32x512xf32, #tpu.memory_space<vmem>>, vector<1x32x384xf32>
    %26 = vector.shape_cast %25 : vector<1x32x384xf32> to vector<32x384xf32>
    %c4 = arith.constant 4 : index
    %c0_25 = arith.constant 0 : index
    %c0_26 = arith.constant 0 : index
    %27 = vector.load %arg2[%c4, %c0_25, %c0_26] : memref<9x32x32xf32, #tpu.memory_space<vmem>>, vector<1x32x32xf32>
    %28 = vector.shape_cast %27 : vector<1x32x32xf32> to vector<32x32xf32>
    %cst_27 = arith.constant dense<0.000000e+00> : vector<32x384xf32>
    %29 = tpu.matmul %28, %26, %cst_27 {dimension_numbers = #tpu.dot_dimension_numbers<[1], [0], [0], [1], [0, 0, 1, 1], [], []>} : vector<32x32xf32>, vector<32x384xf32>, vector<32x384xf32> -> vector<32x384xf32>
    %30 = arith.addf %24, %29 : vector<32x384xf32>
    %c0_28 = arith.constant 0 : index
    %c0_29 = arith.constant 0 : index
    %c20 = arith.constant 20 : index
    %31 = vector.load %arg1[%c0_28, %c0_29, %c20] : memref<1x32x512xf32, #tpu.memory_space<vmem>>, vector<1x32x384xf32>
    %32 = vector.shape_cast %31 : vector<1x32x384xf32> to vector<32x384xf32>
    %c5 = arith.constant 5 : index
    %c0_30 = arith.constant 0 : index
    %c0_31 = arith.constant 0 : index
    %33 = vector.load %arg2[%c5, %c0_30, %c0_31] : memref<9x32x32xf32, #tpu.memory_space<vmem>>, vector<1x32x32xf32>
    %34 = vector.shape_cast %33 : vector<1x32x32xf32> to vector<32x32xf32>
    %cst_32 = arith.constant dense<0.000000e+00> : vector<32x384xf32>
    %35 = tpu.matmul %34, %32, %cst_32 {dimension_numbers = #tpu.dot_dimension_numbers<[1], [0], [0], [1], [0, 0, 1, 1], [], []>} : vector<32x32xf32>, vector<32x384xf32>, vector<32x384xf32> -> vector<32x384xf32>
    %36 = arith.addf %30, %35 : vector<32x384xf32>
    %c0_33 = arith.constant 0 : index
    %c0_34 = arith.constant 0 : index
    %c36 = arith.constant 36 : index
    %37 = vector.load %arg1[%c0_33, %c0_34, %c36] : memref<1x32x512xf32, #tpu.memory_space<vmem>>, vector<1x32x384xf32>
    %38 = vector.shape_cast %37 : vector<1x32x384xf32> to vector<32x384xf32>
    %c6 = arith.constant 6 : index
    %c0_35 = arith.constant 0 : index
    %c0_36 = arith.constant 0 : index
    %39 = vector.load %arg2[%c6, %c0_35, %c0_36] : memref<9x32x32xf32, #tpu.memory_space<vmem>>, vector<1x32x32xf32>
    %40 = vector.shape_cast %39 : vector<1x32x32xf32> to vector<32x32xf32>
    %cst_37 = arith.constant dense<0.000000e+00> : vector<32x384xf32>
    %41 = tpu.matmul %40, %38, %cst_37 {dimension_numbers = #tpu.dot_dimension_numbers<[1], [0], [0], [1], [0, 0, 1, 1], [], []>} : vector<32x32xf32>, vector<32x384xf32>, vector<32x384xf32> -> vector<32x384xf32>
    %42 = arith.addf %36, %41 : vector<32x384xf32>
    %c0_38 = arith.constant 0 : index
    %c0_39 = arith.constant 0 : index
    %c37 = arith.constant 37 : index
    %43 = vector.load %arg1[%c0_38, %c0_39, %c37] : memref<1x32x512xf32, #tpu.memory_space<vmem>>, vector<1x32x384xf32>
    %44 = vector.shape_cast %43 : vector<1x32x384xf32> to vector<32x384xf32>
    %c7 = arith.constant 7 : index
    %c0_40 = arith.constant 0 : index
    %c0_41 = arith.constant 0 : index
    %45 = vector.load %arg2[%c7, %c0_40, %c0_41] : memref<9x32x32xf32, #tpu.memory_space<vmem>>, vector<1x32x32xf32>
    %46 = vector.shape_cast %45 : vector<1x32x32xf32> to vector<32x32xf32>
    %cst_42 = arith.constant dense<0.000000e+00> : vector<32x384xf32>
    %47 = tpu.matmul %46, %44, %cst_42 {dimension_numbers = #tpu.dot_dimension_numbers<[1], [0], [0], [1], [0, 0, 1, 1], [], []>} : vector<32x32xf32>, vector<32x384xf32>, vector<32x384xf32> -> vector<32x384xf32>
    %48 = arith.addf %42, %47 : vector<32x384xf32>
    %c0_43 = arith.constant 0 : index
    %c0_44 = arith.constant 0 : index
    %c38 = arith.constant 38 : index
    %49 = vector.load %arg1[%c0_43, %c0_44, %c38] : memref<1x32x512xf32, #tpu.memory_space<vmem>>, vector<1x32x384xf32>
    %50 = vector.shape_cast %49 : vector<1x32x384xf32> to vector<32x384xf32>
    %c8 = arith.constant 8 : index
    %c0_45 = arith.constant 0 : index
    %c0_46 = arith.constant 0 : index
    %51 = vector.load %arg2[%c8, %c0_45, %c0_46] : memref<9x32x32xf32, #tpu.memory_space<vmem>>, vector<1x32x32xf32>
    %52 = vector.shape_cast %51 : vector<1x32x32xf32> to vector<32x32xf32>
    %cst_47 = arith.constant dense<0.000000e+00> : vector<32x384xf32>
    %53 = tpu.matmul %52, %50, %cst_47 {dimension_numbers = #tpu.dot_dimension_numbers<[1], [0], [0], [1], [0, 0, 1, 1], [], []>} : vector<32x32xf32>, vector<32x384xf32>, vector<32x384xf32> -> vector<32x384xf32>
    %54 = arith.addf %48, %53 : vector<32x384xf32>
    %c0_48 = arith.constant 0 : index
    %c0_49 = arith.constant 0 : index
    %55 = vector.load %arg3[%c0_48, %c0_49] : memref<32x1xf32, #tpu.memory_space<vmem>>, vector<32x1xf32>
    %56 = vector.broadcast %55 : vector<32x1xf32> to vector<32x384xf32>
    %57 = arith.addf %54, %56 : vector<32x384xf32>
    %cst_50 = arith.constant 0.000000e+00 : f32
    %58 = vector.broadcast %cst_50 : f32 to vector<32x384xf32>
    %59 = arith.maximumf %57, %58 : vector<32x384xf32>
    %c0_51 = arith.constant 0 : index
    %c0_52 = arith.constant 0 : index
    %c0_53 = arith.constant 0 : index
    %60 = vector.load %arg4[%c0_51, %c0_52, %c0_53] : memref<1x32x384xf32, #tpu.memory_space<vmem>>, vector<1x32x384xf32>
    %61 = vector.shape_cast %60 : vector<1x32x384xf32> to vector<32x384xf32>
    %62 = vector.shape_cast %59 : vector<32x384xf32> to vector<1x32x384xf32>
    tpu.vector_store %arg4[%c0_51, %c0_52, %c0_53], %62 {strides = array<i32>} : memref<1x32x384xf32, #tpu.memory_space<vmem>>, vector<1x32x384xf32>,
    return
  }
  func.func @transform_0(%arg0: i32) -> (i32, i32, i32) {
    %c0_i32 = arith.constant 0 : i32
    %c0_i32_0 = arith.constant 0 : i32
    %c0_i32_1 = arith.constant 0 : i32
    return %arg0, %c0_i32, %c0_i32_0 : i32, i32, i32
  }
  func.func @transform_1(%arg0: i32) -> (i32, i32, i32) {
    %c0_i32 = arith.constant 0 : i32
    %c0_i32_0 = arith.constant 0 : i32
    %c0_i32_1 = arith.constant 0 : i32
    %c0_i32_2 = arith.constant 0 : i32
    return %c0_i32, %c0_i32_0, %c0_i32_1 : i32, i32, i32
  }
  func.func @transform_2(%arg0: i32) -> (i32, i32) {
    %c0_i32 = arith.constant 0 : i32
    %c0_i32_0 = arith.constant 0 : i32
    %c0_i32_1 = arith.constant 0 : i32
    return %c0_i32, %c0_i32_0 : i32, i32
  }
  func.func @transform_3(%arg0: i32) -> (i32, i32, i32) {
    %c0_i32 = arith.constant 0 : i32
    %c0_i32_0 = arith.constant 0 : i32
    %c0_i32_1 = arith.constant 0 : i32
    return %arg0, %c0_i32, %c0_i32_0 : i32, i32, i32
  }
}

</mosaic_0001>

<llo_original>
// kernel: tpu_custom_call.1
$region0: #{tpu_custom_call.1}
  #allocation0 [shape = 'u32[]', space=smem, size = 0x4, offset = 0x4, fixed_abs, tag = 'smem constant byte address 0x4 - core index']
  #allocation1 [shape = 'u32[144,128]{1,0:T(1,128)}', space=vmem, size = 0x12000, scoped, tag = 'internal scratch']
  %s0 = inlined_call_operand.hbm [shape: f32[2,32,512], index: 0, kind: input, shape index: {}]
  %s1 = inlined_call_operand.hbm [shape: f32[9,32,32], index: 1, kind: input, shape index: {}]
  %s2 = inlined_call_operand.vmem [shape: f32[32,1], index: 2, kind: input, shape index: {}]
  %s3 = inlined_call_operand.hbm [shape: f32[2,32,384], index: 3, kind: output, shape index: {}]
  %s4 = sld [smem:[#allocation0]]
  $region53: #{tpu_custom_call.1} parent=0
    _
  %s6 = ssub.s32 1, %s4
  %s7 = scalar_select 0, %s6, %s4
  $region1: #{tpu_custom_call.1} parent=0
    #allocation2 [shape = 'u8[131072]{0}', space=vmem, size = 0x20000, scoped, tag = 'input window, operand 0']
    #allocation3 [shape = 's32[2]{0}', space=sflag, size = 0x8, scoped, tag = 'scoped memory for tpu_custom_call.1']
    #allocation4 [shape = 's32[2]{0}', space=sflag, size = 0x8, scoped, tag = 'scoped memory for tpu_custom_call.1']
    #allocation5 [shape = 'u8[147456]{0}', space=vmem, size = 0x24000, scoped, tag = 'input window, operand 1, single buffered']
    #allocation6 [shape = 's32[1]{0}', space=sflag, size = 0x4, scoped, tag = 'scoped memory for tpu_custom_call.1']
    #allocation7 [shape = 'u8[98304]{0}', space=vmem, size = 0x18000, scoped, tag = 'output window, operand 0']
    %8 = vsyncpa [#allocation3], 0
    %s9 = scalar_lea.sflag [#allocation3], 1
    %10 = vsyncpa %s9, 0
    %11 = vsyncpa [#allocation6], 0
    %12 = vsyncpa [#allocation4], 0
    %s13 = scalar_lea.sflag [#allocation4], 1
    %14 = vsyncpa %s13, 0
    loop: start=0, step=1, limit=4
    $region2: #{tpu_custom_call.1} parent=1 // loop_pre_header
      _
    $region3: #{tpu_custom_call.1} parent=1 // loop_header
      %s16 = sphi 0, %s20
      %p17 = scmp.ge.s32.totalorder %s16, 4
      %s26 = sphi 0, %s28
      %s29 = sphi 0, %s26
      %s30 = sphi 0, %s29
      %s46 = sphi 0, %s30
      %s50 = sphi 0, %s50
      %s52 = sphi 0, %s50
      %s53 = sphi 0, %s52
      %s67 = sphi 0, %s53
      %s71 = sphi 0, %s71
      %s73 = sphi 0, %s71
      %s74 = sphi 0, %s73
      %s88 = sphi 0, %s74
      %s94 = sphi 0, %s96
      %s97 = sphi 0, %s94
      %s98 = sphi 0, %s97
      %s114 = sphi 0, %s98
    $region4: #{tpu_custom_call.1} parent=1 // loop_header_branch
      %19 = sbr.rel (%p17) target = $region8
    $region5: #{tpu_custom_call.1} parent=1 // loop_body
      %s21 = ssub.s32 %s16, 1
      %s22 = ssub.s32 %s16, 2
      %s23 = sadd.s32 %s16, 1
      %s24 = ssub.s32 %s16, %s23
      %p25 = scmp.eq.s32.totalorder %s24, 0
      %s27 = sadd.s32 %s26, 1
      %s28 = scalar_select %p25, %s26, %s27
      %p31 = pneg %p25
      %p32 = scmp.eq.s32.totalorder %s16, 1
      %p33 = por %p31, %p32
      %p34 = scmp.ne.s32.totalorder %s26, %s29
      %p35 = scmp.eq.s32.totalorder %s16, 0
      %p36 = por %p34, %p35
      %p37 = scmp.ne.s32.totalorder %s26, %s29
      %p38 = scmp.eq.s32.totalorder %s21, 1
      %p39 = por %p37, %p38
      %p40 = scmp.ne.s32.totalorder %s29, %s30
      %p41 = scmp.eq.s32.totalorder %s21, 0
      %p42 = por %p40, %p41
      %p43 = scmp.ne.s32.totalorder %s29, %s30
      %p44 = scmp.eq.s32.totalorder %s22, 1
      %p45 = por %p43, %p44
      %p47 = scmp.ne.s32.totalorder %s30, %s46
      %p48 = scmp.eq.s32.totalorder %s22, 0
      %p49 = por %p47, %p48
      %s51 = sadd.s32 %s50, 1
      %p54 = scmp.eq.s32.totalorder %s16, 1
      %p55 = scmp.ne.s32.totalorder %s50, %s52
      %p56 = scmp.eq.s32.totalorder %s16, 0
      %p57 = por %p55, %p56
      %p58 = scmp.ne.s32.totalorder %s50, %s52
      %p59 = scmp.eq.s32.totalorder %s21, 1
      %p60 = por %p58, %p59
      %p61 = scmp.ne.s32.totalorder %s52, %s53
      %p62 = scmp.eq.s32.totalorder %s21, 0
      %p63 = por %p61, %p62
      %p64 = scmp.ne.s32.totalorder %s52, %s53
      %p65 = scmp.eq.s32.totalorder %s22, 1
      %p66 = por %p64, %p65
      %p68 = scmp.ne.s32.totalorder %s53, %s67
      %p69 = scmp.eq.s32.totalorder %s22, 0
      %p70 = por %p68, %p69
      %s72 = sadd.s32 %s71, 1
      %p75 = scmp.eq.s32.totalorder %s16, 1
      %p76 = scmp.ne.s32.totalorder %s71, %s73
      %p77 = scmp.eq.s32.totalorder %s16, 0
      %p78 = por %p76, %p77
      %p79 = scmp.ne.s32.totalorder %s71, %s73
      %p80 = scmp.eq.s32.totalorder %s21, 1
      %p81 = por %p79, %p80
      %p82 = scmp.ne.s32.totalorder %s73, %s74
      %p83 = scmp.eq.s32.totalorder %s21, 0
      %p84 = por %p82, %p83
      %p85 = scmp.ne.s32.totalorder %s73, %s74
      %p86 = scmp.eq.s32.totalorder %s22, 1
      %p87 = por %p85, %p86
      %p89 = scmp.ne.s32.totalorder %s74, %s88
      %p90 = scmp.eq.s32.totalorder %s22, 0
      %p91 = por %p89, %p90
      %s92 = ssub.s32 %s16, %s23
      %p93 = scmp.eq.s32.totalorder %s92, 0
      %s95 = sadd.s32 %s94, 1
      %s96 = scalar_select %p93, %s94, %s95
      %p99 = pneg %p93
      %p100 = scmp.eq.s32.totalorder %s16, 1
      %p101 = por %p99, %p100
      %p102 = scmp.ne.s32.totalorder %s94, %s97
      %p103 = scmp.eq.s32.totalorder %s16, 0
      %p104 = por %p102, %p103
      %p105 = scmp.ne.s32.totalorder %s94, %s97
      %p106 = scmp.eq.s32.totalorder %s21, 1
      %p107 = por %p105, %p106
      %p108 = scmp.ne.s32.totalorder %s97, %s98
      %p109 = scmp.eq.s32.totalorder %s21, 0
      %p110 = por %p108, %p109
      %p111 = scmp.ne.s32.totalorder %s97, %s98
      %p112 = scmp.eq.s32.totalorder %s22, 1
      %p113 = por %p111, %p112
      %p115 = scmp.ne.s32.totalorder %s98, %s114
      %p116 = scmp.eq.s32.totalorder %s22, 0
      %p117 = por %p115, %p116
      %p118 = scmp.le.s32.totalorder 1, %s16
      %p119 = scmp.lt.s32.totalorder %s16, 3
      %p120 = pnand %p118, %p119
      %p121 = pneg %p120
      // Predicated region
      $region9: #{tpu_custom_call.1} parent=5 // pred_check
        _
      $region10: #{tpu_custom_call.1} parent=5 // pred_check_branch
        %123 = sbr.rel (%p120) target = $region12
      $region11: #{tpu_custom_call.1} parent=5 // pred_region
        %s124 = ssub.s32 %s16, 1
        // Predicated region
        $region13: #{tpu_custom_call.1} parent=11 // pred_check
          %p125 = pneg %p63
        $region14: #{tpu_custom_call.1} parent=11 // pred_check_branch
          %127 = sbr.rel (%p125) target = $region16
        $region15: #{tpu_custom_call.1} parent=11 // pred_region
          %s129 = ssub.s32 4608, 4608
          %130 = vsyncadd [#allocation6], %s129
          %s131 = sshll.u32 [#allocation5], 4
          %s132 = int_to_ptr.vmem [resolvable:$true] %s131
          %137 = dma.hbm_to_vmem [thread:$0]  %s1, 4608, %s132, [#allocation6], 128, 128, 8
        $region16: #{tpu_custom_call.1} parent=11 // pred_fallthru
          _
        // Predicated region
        $region17: #{tpu_custom_call.1} parent=11 // pred_check
          %p138 = pneg %p84
        $region18: #{tpu_custom_call.1} parent=11 // pred_check_branch
          %140 = sbr.rel (%p138) target = $region20
        $region19: #{tpu_custom_call.1} parent=11 // pred_region
          _
        $region20: #{tpu_custom_call.1} parent=11 // pred_fallthru
          _
      $region12: #{tpu_custom_call.1} parent=5 // pred_fallthru
        _
      %p141 = scmp.lt.s32.totalorder %s16, 2
      // Predicated region
      $region21: #{tpu_custom_call.1} parent=5 // pred_check
        %p142 = pneg %p141
      $region22: #{tpu_custom_call.1} parent=5 // pred_check_branch
        %144 = sbr.rel (%p142) target = $region24
      $region23: #{tpu_custom_call.1} parent=5 // pred_region
        // Predicated region
        $region25: #{tpu_custom_call.1} parent=23 // pred_check
          %p145 = pneg %p36
        $region26: #{tpu_custom_call.1} parent=23 // pred_check_branch
          %147 = sbr.rel (%p145) target = $region28
        $region27: #{tpu_custom_call.1} parent=23 // pred_region
          %s148 = sand.u32 %s26, 1
          %s149 = scalar_lea.sflag [#allocation3], %s148
          %s150 = sand.u32 %s26, 1
          %s151 = smul.addr %s150, 128
          %s152 = scalar_lea.vmem [#allocation2], %s151
          %s154 = ssub.s32 2048, 2048
          %155 = vsyncadd %s149, %s154
          %s156 = smul.addr %s16, 16
          %s157 = smul.addr %s156, 128
          %s158 = scalar_lea.hbm %s0, %s157
          %s159 = sshll.u32 %s152, 4
          %s160 = int_to_ptr.vmem [resolvable:$true] %s159
          %165 = dma.hbm_to_vmem [thread:$0]  %s158, 2048, %s160, %s149, 512, 512, 32
        $region28: #{tpu_custom_call.1} parent=23 // pred_fallthru
          _
      $region24: #{tpu_custom_call.1} parent=5 // pred_fallthru
        _
      %p166 = scmp.le.s32.totalorder 1, %s16
      %p167 = scmp.lt.s32.totalorder %s16, 3
      %p168 = pnand %p166, %p167
      %p169 = pneg %p168
      // Predicated region
      $region29: #{tpu_custom_call.1} parent=5 // pred_check
        _
      $region30: #{tpu_custom_call.1} parent=5 // pred_check_branch
        %171 = sbr.rel (%p168) target = $region32
      $region31: #{tpu_custom_call.1} parent=5 // pred_region
        %s172 = ssub.s32 %s16, 1
        %s173 = sand.u32 %s29, 1
        %s174 = scalar_lea.sflag [#allocation3], %s173
        %s175 = sand.u32 %s29, 1
        %s176 = smul.addr %s175, 128
        %s177 = scalar_lea.vmem [#allocation2], %s176
        // Predicated region
        $region33: #{tpu_custom_call.1} parent=31 // pred_check
          %p178 = pneg %p42
        $region34: #{tpu_custom_call.1} parent=31 // pred_check_branch
          %180 = sbr.rel (%p178) target = $region36
        $region35: #{tpu_custom_call.1} parent=31 // pred_region
          %181 = dma.done %s174, 2048
        $region36: #{tpu_custom_call.1} parent=31 // pred_fallthru
          _
        // Predicated region
        $region37: #{tpu_custom_call.1} parent=31 // pred_check
          %p182 = pneg %p63
        $region38: #{tpu_custom_call.1} parent=31 // pred_check_branch
          %184 = sbr.rel (%p182) target = $region40
        $region39: #{tpu_custom_call.1} parent=31 // pred_region
          %185 = dma.done [#allocation6], 4608
        $region40: #{tpu_custom_call.1} parent=31 // pred_fallthru
          _
        %s186 = sand.u32 %s29, 1
        %s187 = scalar_lea.sflag [#allocation3], %s186
        %s188 = sand.u32 %s29, 1
        %s189 = smul.addr %s188, 128
        %s190 = scalar_lea.vmem [#allocation2], %s189
        %p191 = pneg %p42
        %p192 = pneg %p39
        %p193 = pneg %p63
        %p194 = pneg %p60
        %p195 = pneg %p84
        %p196 = pneg %p81
        %p197 = pneg %p110
        %p198 = pneg %p107
        %s199 = sand.u32 %s97, 1
        %s200 = scalar_lea.sflag [#allocation4], %s199
        %s201 = sand.u32 %s97, 1
        %s202 = smul.addr %s201, 96
        %s203 = scalar_lea.vmem [#allocation7], %s202
        %v204 = vld [vmem:[%s177] sm:$0xff]
        %v205 = vld [vmem:[%s177 + $0x8] sm:$0xff]
        %v206 = vld [vmem:[%s177 + $0x10] sm:$0xff]
        %v207 = vld [vmem:[%s177 + $0x20] sm:$0xff]
        %v208 = vld [vmem:[%s177 + $0x28] sm:$0xff]
        %v209 = vld [vmem:[%s177 + $0x30] sm:$0xff]
        %v210 = vld [vmem:[%s177 + $0x40] sm:$0xff]
        %v211 = vld [vmem:[%s177 + $0x48] sm:$0xff]
        %v212 = vld [vmem:[%s177 + $0x50] sm:$0xff]
        %v213 = vld [vmem:[%s177 + $0x60] sm:$0xff]
        %v214 = vld [vmem:[%s177 + $0x68] sm:$0xff]
        %v215 = vld [vmem:[%s177 + $0x70] sm:$0xff]
        %v216 = vld [vmem:[#allocation5] sm:$0xff]
        %v217 = vld [vmem:[#allocation5 + $0x8] sm:$0xff]
        %v218 = vld [vmem:[#allocation5 + $0x10] sm:$0xff]
        %v219 = vld [vmem:[#allocation5 + $0x18] sm:$0xff]
        %v220 = vld [vmem:[%s177] sm:$0xff]
        %v221 = vld [vmem:[%s177 + $0x8] sm:$0xff]
        %v222 = vld [vmem:[%s177 + $0x10] sm:$0xff]
        %v223 = vld [vmem:[%s177 + $0x18] sm:$0xff]
        %v224 = vld [vmem:[%s177 + $0x20] sm:$0xff]
        %v225 = vld [vmem:[%s177 + $0x28] sm:$0xff]
        %v226 = vld [vmem:[%s177 + $0x30] sm:$0xff]
        %v227 = vld [vmem:[%s177 + $0x38] sm:$0xff]
        %v228 = vld [vmem:[%s177 + $0x40] sm:$0xff]
        %v229 = vld [vmem:[%s177 + $0x48] sm:$0xff]
        %v230 = vld [vmem:[%s177 + $0x50] sm:$0xff]
        %v231 = vld [vmem:[%s177 + $0x58] sm:$0xff]
        %v232 = vld [vmem:[%s177 + $0x60] sm:$0xff]
        %v233 = vld [vmem:[%s177 + $0x68] sm:$0xff]
        %v234 = vld [vmem:[%s177 + $0x70] sm:$0xff]
        %v235 = vld [vmem:[%s177 + $0x78] sm:$0xff]
        %s236 = scalar_lea.vmem [#allocation5], 32
        %v237 = vld [vmem:[%s236] sm:$0xff]
        %v238 = vld [vmem:[%s236 + $0x8] sm:$0xff]
        %v239 = vld [vmem:[%s236 + $0x10] sm:$0xff]
        %v240 = vld [vmem:[%s236 + $0x18] sm:$0xff]
        %257 = vrot.lane.b32.xlu0 %v220, 127
        %v258 = vpop.permute.xlu0 %257
        %259 = vrot.lane.b32.xlu0 %v221, 127
        %v260 = vpop.permute.xlu0 %259
        %261 = vrot.lane.b32.xlu0 %v222, 127
        %v262 = vpop.permute.xlu0 %261
        %263 = vrot.lane.b32.xlu0 %v223, 127
        %v264 = vpop.permute.xlu0 %263
        %265 = vrot.lane.b32.xlu0 %v224, 127
        %v266 = vpop.permute.xlu0 %265
        %267 = vrot.lane.b32.xlu0 %v225, 127
        %v268 = vpop.permute.xlu0 %267
        %269 = vrot.lane.b32.xlu0 %v226, 127
        %v270 = vpop.permute.xlu0 %269
        %271 = vrot.lane.b32.xlu0 %v227, 127
        %v272 = vpop.permute.xlu0 %271
        %273 = vrot.lane.b32.xlu0 %v228, 127
        %v274 = vpop.permute.xlu0 %273
        %275 = vrot.lane.b32.xlu0 %v229, 127
        %v276 = vpop.permute.xlu0 %275
        %277 = vrot.lane.b32.xlu0 %v230, 127
        %v278 = vpop.permute.xlu0 %277
        %279 = vrot.lane.b32.xlu0 %v231, 127
        %v280 = vpop.permute.xlu0 %279
        %281 = vrot.lane.b32.xlu0 %v232, 127
        %v282 = vpop.permute.xlu0 %281
        %283 = vrot.lane.b32.xlu0 %v233, 127
        %v284 = vpop.permute.xlu0 %283
        %285 = vrot.lane.b32.xlu0 %v234, 127
        %v286 = vpop.permute.xlu0 %285
        %287 = vrot.lane.b32.xlu0 %v235, 127
        %v288 = vpop.permute.xlu0 %287
        %vm289 = vcmask 1039360
        %v290 = vsel %vm289, %v258, %v260
        %v291 = vsel %vm289, %v260, %v262
        %v292 = vsel %vm289, %v262, %v264
        %v293 = vsel %vm289, %v266, %v268
        %v294 = vsel %vm289, %v268, %v270
        %v295 = vsel %vm289, %v270, %v272
        %v296 = vsel %vm289, %v274, %v276
        %v297 = vsel %vm289, %v276, %v278
        %v298 = vsel %vm289, %v278, %v280
        %v299 = vsel %vm289, %v282, %v284
        %v300 = vsel %vm289, %v284, %v286
        %v301 = vsel %vm289, %v286, %v288
        %vm314 = vcmask 261120
        %v316 = vsel %vm314, %v237, 0
        %v319 = vsel %vm314, %v238, 0
        %v322 = vsel %vm314, %v239, 0
        %v325 = vsel %vm314, %v240, 0
        %327 = vmatprep.subr.mxu0 %v291
        %328 = vmatpush1.msra.mxu0 %v290
        %329 = vmatprep.subr.mxu0 %v294
        %330 = vmatpush1.msra.mxu0 %v293
        %331 = vmatprep.subr.mxu0 %v297
        %332 = vmatpush1.msra.mxu0 %v296
        %333 = vmatprep.subr.mxu0 %v300
        %334 = vmatpush1.msra.mxu0 %v299
        %335 = vmatprep.subr.mxu0 0.0
        %336 = vmatpush1.msra.mxu0 0.0
        %337 = vmatprep.subr.mxu0 0.0
        %338 = vmatpush1.msra.mxu0 0.0
        %339 = vmatprep.subr.mxu0 0.0
        %340 = vmatpush1.msra.mxu0 0.0
        %341 = vmatprep.subr.mxu0 0.0
        %342 = vmatpush1.msra.mxu0 0.0
        %343 = vmatprep.subr.mxu0 0.0
        %344 = vmatpush1.msra.mxu0 0.0
        %345 = vmatprep.subr.mxu0 0.0
        %346 = vmatpush1.msra.mxu0 0.0
        %347 = vmatprep.subr.mxu0 0.0
        %348 = vmatpush1.msra.mxu0 0.0
        %349 = vmatprep.subr.mxu0 0.0
        %350 = vmatpush1.msra.mxu0 0.0
        %351 = vmatprep.subr.mxu0 0.0
        %352 = vmatpush1.msra.mxu0 0.0
        %353 = vmatprep.subr.mxu0 0.0
        %354 = vmatpush1.msra.mxu0 0.0
        %355 = vmatprep.subr.mxu0 0.0
        %356 = vmatpush1.msra.mxu0 0.0
        %357 = vmatprep.subr.mxu0 0.0
        %358 = vmatpush1.msra.mxu0 0.0
        %359 = vmatprep.subr.mxu0 0.0
        %360 = vmatpush1.msra.mxu0 0.0
        %361 = vmatprep.subr.mxu0 0.0
        %362 = vmatpush1.msra.mxu0 0.0
        %363 = vmatprep.subr.mxu0 0.0
        %364 = vmatpush1.msra.mxu0 0.0
        %365 = vmatprep.subr.mxu0 0.0
        %366 = vmatpush1.msra.mxu0 0.0
        %367 = vmatprep.subr.mxu0 0.0
        %368 = vmatpush1.msra.mxu0 0.0
        %369 = vmatprep.subr.mxu0 0.0
        %370 = vmatpush1.msra.mxu0 0.0
        %371 = vmatprep.subr.mxu0 0.0
        %372 = vmatpush1.msra.mxu0 0.0
        %373 = vmatprep.subr.mxu0 0.0
        %374 = vmatpush1.msra.mxu0 0.0
        %375 = vmatprep.subr.mxu0 0.0
        %376 = vmatpush1.msra.mxu0 0.0
        %377 = vmatprep.subr.mxu0 0.0
        %378 = vmatpush1.msra.mxu0 0.0
        %379 = vmatprep.subr.mxu0 0.0
        %380 = vmatpush1.msra.mxu0 0.0
        %381 = vmatprep.subr.mxu0 0.0
        %382 = vmatpush1.msra.mxu0 0.0
        %383 = vmatprep.subr.mxu0 0.0
        %384 = vmatpush1.msra.mxu0 0.0
        %385 = vmatprep.subr.mxu0 0.0
        %386 = vmatpush1.msra.mxu0 0.0
        %387 = vmatprep.subr.mxu0 0.0
        %388 = vmatpush1.msra.mxu0 0.0
        %389 = vmatprep.subr.mxu0 0.0
        %390 = vmatpush1.msra.mxu0 0.0
        %391 = vmatprep.mubr.f32.mxu0 0.0
        %392 = vmatmul.mubr.f32.gmra.mrb[0].mxu0 %v316
        %v393 = vpop.f32.mrb[0].mxu0
        %v394 = vadd.f32 0.0, %v393
        %v395 = vpop.f32.mrb[0].mxu0
        %v396 = vadd.f32 0.0, %v395
        %397 = vmatprep.mubr.f32.mxu0 0.0
        %398 = vmatmul.mubr.f32.gmra.mrb[0].mxu0 %v319
        %v399 = vpop.f32.mrb[0].mxu0
        %v400 = vadd.f32 0.0, %v399
        %v401 = vpop.f32.mrb[0].mxu0
        %v402 = vadd.f32 0.0, %v401
        %403 = vmatprep.mubr.f32.mxu0 0.0
        %404 = vmatmul.mubr.f32.gmra.mrb[0].mxu0 %v322
        %v405 = vpop.f32.mrb[0].mxu0
        %v406 = vadd.f32 0.0, %v405
        %v407 = vpop.f32.mrb[0].mxu0
        %v408 = vadd.f32 0.0, %v407
        %409 = vmatprep.mubr.f32.mxu0 0.0
        %410 = vmatmul.mubr.f32.gmra.mrb[0].mxu0 %v325
        %v411 = vpop.f32.mrb[0].mxu0
        %v412 = vadd.f32 0.0, %v411
        %v413 = vpop.f32.mrb[0].mxu0
        %v414 = vadd.f32 0.0, %v413
        %415 = vdwg.mxu0
        %416 = vmatprep.subr.mxu0 0.0
        %417 = vmatpush1.msra.mxu0 %v292
        %418 = vmatprep.subr.mxu0 0.0
        %419 = vmatpush1.msra.mxu0 %v295
        %420 = vmatprep.subr.mxu0 0.0
        %421 = vmatpush1.msra.mxu0 %v298
        %422 = vmatprep.subr.mxu0 0.0
        %423 = vmatpush1.msra.mxu0 %v301
        %424 = vmatprep.subr.mxu0 0.0
        %425 = vmatpush1.msra.mxu0 0.0
        %426 = vmatprep.subr.mxu0 0.0
        %427 = vmatpush1.msra.mxu0 0.0
        %428 = vmatprep.subr.mxu0 0.0
        %429 = vmatpush1.msra.mxu0 0.0
        %430 = vmatprep.subr.mxu0 0.0
        %431 = vmatpush1.msra.mxu0 0.0
        %432 = vmatprep.subr.mxu0 0.0
        %433 = vmatpush1.msra.mxu0 0.0
        %434 = vmatprep.subr.mxu0 0.0
        %435 = vmatpush1.msra.mxu0 0.0
        %436 = vmatprep.subr.mxu0 0.0
        %437 = vmatpush1.msra.mxu0 0.0
        %438 = vmatprep.subr.mxu0 0.0
        %439 = vmatpush1.msra.mxu0 0.0
        %440 = vmatprep.subr.mxu0 0.0
        %441 = vmatpush1.msra.mxu0 0.0
        %442 = vmatprep.subr.mxu0 0.0
        %443 = vmatpush1.msra.mxu0 0.0
        %444 = vmatprep.subr.mxu0 0.0
        %445 = vmatpush1.msra.mxu0 0.0
        %446 = vmatprep.subr.mxu0 0.0
        %447 = vmatpush1.msra.mxu0 0.0
        %448 = vmatprep.subr.mxu0 0.0
        %449 = vmatpush1.msra.mxu0 0.0
        %450 = vmatprep.subr.mxu0 0.0
        %451 = vmatpush1.msra.mxu0 0.0
        %452 = vmatprep.subr.mxu0 0.0
        %453 = vmatpush1.msra.mxu0 0.0
        %454 = vmatprep.subr.mxu0 0.0
        %455 = vmatpush1.msra.mxu0 0.0
        %456 = vmatprep.subr.mxu0 0.0
        %457 = vmatpush1.msra.mxu0 0.0
        %458 = vmatprep.subr.mxu0 0.0
        %459 = vmatpush1.msra.mxu0 0.0
        %460 = vmatprep.subr.mxu0 0.0
        %461 = vmatpush1.msra.mxu0 0.0
        %462 = vmatprep.subr.mxu0 0.0
        %463 = vmatpush1.msra.mxu0 0.0
        %464 = vmatprep.subr.mxu0 0.0
        %465 = vmatpush1.msra.mxu0 0.0
        %466 = vmatprep.subr.mxu0 0.0
        %467 = vmatpush1.msra.mxu0 0.0
        %468 = vmatprep.subr.mxu0 0.0
        %469 = vmatpush1.msra.mxu0 0.0
        %470 = vmatprep.subr.mxu0 0.0
        %471 = vmatpush1.msra.mxu0 0.0
        %472 = vmatprep.subr.mxu0 0.0
        %473 = vmatpush1.msra.mxu0 0.0
        %474 = vmatprep.subr.mxu0 0.0
        %475 = vmatpush1.msra.mxu0 0.0
        %476 = vmatprep.subr.mxu0 0.0
        %477 = vmatpush1.msra.mxu0 0.0
        %478 = vmatprep.subr.mxu0 0.0
        %479 = vmatpush1.msra.mxu0 0.0
        %480 = vmatprep.mubr.f32.mxu0 0.0
        %481 = vmatmul.mubr.f32.gmra.mrb[0].mxu0 %v316
        %v482 = vpop.f32.mrb[0].mxu0
        %v483 = vadd.f32 0.0, %v482
        %v484 = vpop.f32.mrb[0].mxu0
        %485 = vmatprep.mubr.f32.mxu0 0.0
        %486 = vmatmul.mubr.f32.gmra.mrb[0].mxu0 %v319
        %v487 = vpop.f32.mrb[0].mxu0
        %v488 = vadd.f32 0.0, %v487
        %v489 = vpop.f32.mrb[0].mxu0
        %490 = vmatprep.mubr.f32.mxu0 0.0
        %491 = vmatmul.mubr.f32.gmra.mrb[0].mxu0 %v322
        %v492 = vpop.f32.mrb[0].mxu0
        %v493 = vadd.f32 0.0, %v492
        %v494 = vpop.f32.mrb[0].mxu0
        %495 = vmatprep.mubr.f32.mxu0 0.0
        %496 = vmatmul.mubr.f32.gmra.mrb[0].mxu0 %v325
        %v497 = vpop.f32.mrb[0].mxu0
        %v498 = vadd.f32 0.0, %v497
        %v499 = vpop.f32.mrb[0].mxu0
        %500 = vdwg.mxu0
        %v502 = vsel %vm314, %v216, 0
        %v505 = vsel %vm314, %v217, 0
        %v508 = vsel %vm314, %v218, 0
        %v511 = vsel %vm314, %v219, 0
        %513 = vmatprep.subr.mxu0 %v205
        %514 = vmatpush1.msra.mxu0 %v204
        %515 = vmatprep.subr.mxu0 %v208
        %516 = vmatpush1.msra.mxu0 %v207
        %517 = vmatprep.subr.mxu0 %v211
        %518 = vmatpush1.msra.mxu0 %v210
        %519 = vmatprep.subr.mxu0 %v214
        %520 = vmatpush1.msra.mxu0 %v213
        %521 = vmatprep.subr.mxu0 0.0
        %522 = vmatpush1.msra.mxu0 0.0
        %523 = vmatprep.subr.mxu0 0.0
        %524 = vmatpush1.msra.mxu0 0.0
        %525 = vmatprep.subr.mxu0 0.0
        %526 = vmatpush1.msra.mxu0 0.0
        %527 = vmatprep.subr.mxu0 0.0
        %528 = vmatpush1.msra.mxu0 0.0
        %529 = vmatprep.subr.mxu0 0.0
        %530 = vmatpush1.msra.mxu0 0.0
        %531 = vmatprep.subr.mxu0 0.0
        %532 = vmatpush1.msra.mxu0 0.0
        %533 = vmatprep.subr.mxu0 0.0
        %534 = vmatpush1.msra.mxu0 0.0
        %535 = vmatprep.subr.mxu0 0.0
        %536 = vmatpush1.msra.mxu0 0.0
        %537 = vmatprep.subr.mxu0 0.0
        %538 = vmatpush1.msra.mxu0 0.0
        %539 = vmatprep.subr.mxu0 0.0
        %540 = vmatpush1.msra.mxu0 0.0
        %541 = vmatprep.subr.mxu0 0.0
        %542 = vmatpush1.msra.mxu0 0.0
        %543 = vmatprep.subr.mxu0 0.0
        %544 = vmatpush1.msra.mxu0 0.0
        %545 = vmatprep.subr.mxu0 0.0
        %546 = vmatpush1.msra.mxu0 0.0
        %547 = vmatprep.subr.mxu0 0.0
        %548 = vmatpush1.msra.mxu0 0.0
        %549 = vmatprep.subr.mxu0 0.0
        %550 = vmatpush1.msra.mxu0 0.0
        %551 = vmatprep.subr.mxu0 0.0
        %552 = vmatpush1.msra.mxu0 0.0
        %553 = vmatprep.subr.mxu0 0.0
        %554 = vmatpush1.msra.mxu0 0.0
        %555 = vmatprep.subr.mxu0 0.0
        %556 = vmatpush1.msra.mxu0 0.0
        %557 = vmatprep.subr.mxu0 0.0
        %558 = vmatpush1.msra.mxu0 0.0
        %559 = vmatprep.subr.mxu0 0.0
        %560 = vmatpush1.msra.mxu0 0.0
        %561 = vmatprep.subr.mxu0 0.0
        %562 = vmatpush1.msra.mxu0 0.0
        %563 = vmatprep.subr.mxu0 0.0
        %564 = vmatpush1.msra.mxu0 0.0
        %565 = vmatprep.subr.mxu0 0.0
        %566 = vmatpush1.msra.mxu0 0.0
        %567 = vmatprep.subr.mxu0 0.0
        %568 = vmatpush1.msra.mxu0 0.0
        %569 = vmatprep.subr.mxu0 0.0
        %570 = vmatpush1.msra.mxu0 0.0
        %571 = vmatprep.subr.mxu0 0.0
        %572 = vmatpush1.msra.mxu0 0.0
        %573 = vmatprep.subr.mxu0 0.0
        %574 = vmatpush1.msra.mxu0 0.0
        %575 = vmatprep.subr.mxu0 0.0
        %576 = vmatpush1.msra.mxu0 0.0
        %577 = vmatprep.mubr.f32.mxu0 0.0
        %578 = vmatmul.mubr.f32.gmra.mrb[0].mxu0 %v502
        %v579 = vpop.f32.mrb[0].mxu0
        %v580 = vadd.f32 %v394, %v579
        %v581 = vpop.f32.mrb[0].mxu0
        %v582 = vadd.f32 %v396, %v581
        %583 = vmatprep.mubr.f32.mxu0 0.0
        %584 = vmatmul.mubr.f32.gmra.mrb[0].mxu0 %v505
        %v585 = vpop.f32.mrb[0].mxu0
        %v586 = vadd.f32 %v400, %v585
        %v587 = vpop.f32.mrb[0].mxu0
        %v588 = vadd.f32 %v402, %v587
        %589 = vmatprep.mubr.f32.mxu0 0.0
        %590 = vmatmul.mubr.f32.gmra.mrb[0].mxu0 %v508
        %v591 = vpop.f32.mrb[0].mxu0
        %v592 = vadd.f32 %v406, %v591
        %v593 = vpop.f32.mrb[0].mxu0
        %v594 = vadd.f32 %v408, %v593
        %595 = vmatprep.mubr.f32.mxu0 0.0
        %596 = vmatmul.mubr.f32.gmra.mrb[0].mxu0 %v511
        %v597 = vpop.f32.mrb[0].mxu0
        %v598 = vadd.f32 %v412, %v597
        %v599 = vpop.f32.mrb[0].mxu0
        %v600 = vadd.f32 %v414, %v599
        %601 = vdwg.mxu0
        %602 = vmatprep.subr.mxu0 0.0
        %603 = vmatpush1.msra.mxu0 %v206
        %604 = vmatprep.subr.mxu0 0.0
        %605 = vmatpush1.msra.mxu0 %v209
        %606 = vmatprep.subr.mxu0 0.0
        %607 = vmatpush1.msra.mxu0 %v212
        %608 = vmatprep.subr.mxu0 0.0
        %609 = vmatpush1.msra.mxu0 %v215
        %610 = vmatprep.subr.mxu0 0.0
        %611 = vmatpush1.msra.mxu0 0.0
        %612 = vmatprep.subr.mxu0 0.0
        %613 = vmatpush1.msra.mxu0 0.0
        %614 = vmatprep.subr.mxu0 0.0
        %615 = vmatpush1.msra.mxu0 0.0
        %616 = vmatprep.subr.mxu0 0.0
        %617 = vmatpush1.msra.mxu0 0.0
        %618 = vmatprep.subr.mxu0 0.0
        %619 = vmatpush1.msra.mxu0 0.0
        %620 = vmatprep.subr.mxu0 0.0
        %621 = vmatpush1.msra.mxu0 0.0
        %622 = vmatprep.subr.mxu0 0.0
        %623 = vmatpush1.msra.mxu0 0.0
        %624 = vmatprep.subr.mxu0 0.0
        %625 = vmatpush1.msra.mxu0 0.0
        %626 = vmatprep.subr.mxu0 0.0
        %627 = vmatpush1.msra.mxu0 0.0
        %628 = vmatprep.subr.mxu0 0.0
        %629 = vmatpush1.msra.mxu0 0.0
        %630 = vmatprep.subr.mxu0 0.0
        %631 = vmatpush1.msra.mxu0 0.0
        %632 = vmatprep.subr.mxu0 0.0
        %633 = vmatpush1.msra.mxu0 0.0
        %634 = vmatprep.subr.mxu0 0.0
        %635 = vmatpush1.msra.mxu0 0.0
        %636 = vmatprep.subr.mxu0 0.0
        %637 = vmatpush1.msra.mxu0 0.0
        %638 = vmatprep.subr.mxu0 0.0
        %639 = vmatpush1.msra.mxu0 0.0
        %640 = vmatprep.subr.mxu0 0.0
        %641 = vmatpush1.msra.mxu0 0.0
        %642 = vmatprep.subr.mxu0 0.0
        %643 = vmatpush1.msra.mxu0 0.0
        %644 = vmatprep.subr.mxu0 0.0
        %645 = vmatpush1.msra.mxu0 0.0
        %646 = vmatprep.subr.mxu0 0.0
        %647 = vmatpush1.msra.mxu0 0.0
        %648 = vmatprep.subr.mxu0 0.0
        %649 = vmatpush1.msra.mxu0 0.0
        %650 = vmatprep.subr.mxu0 0.0
        %651 = vmatpush1.msra.mxu0 0.0
        %652 = vmatprep.subr.mxu0 0.0
        %653 = vmatpush1.msra.mxu0 0.0
        %654 = vmatprep.subr.mxu0 0.0
        %655 = vmatpush1.msra.mxu0 0.0
        %656 = vmatprep.subr.mxu0 0.0
        %657 = vmatpush1.msra.mxu0 0.0
        %658 = vmatprep.subr.mxu0 0.0
        %659 = vmatpush1.msra.mxu0 0.0
        %660 = vmatprep.subr.mxu0 0.0
        %661 = vmatpush1.msra.mxu0 0.0
        %662 = vmatprep.subr.mxu0 0.0
        %663 = vmatpush1.msra.mxu0 0.0
        %664 = vmatprep.subr.mxu0 0.0
        %665 = vmatpush1.msra.mxu0 0.0
        %666 = vmatprep.mubr.f32.mxu0 0.0
        %667 = vmatmul.mubr.f32.gmra.mrb[0].mxu0 %v502
        %v668 = vpop.f32.mrb[0].mxu0
        %v669 = vadd.f32 %v483, %v668
        %v670 = vpop.f32.mrb[0].mxu0
        %671 = vmatprep.mubr.f32.mxu0 0.0
        %672 = vmatmul.mubr.f32.gmra.mrb[0].mxu0 %v505
        %v673 = vpop.f32.mrb[0].mxu0
        %v674 = vadd.f32 %v488, %v673
        %v675 = vpop.f32.mrb[0].mxu0
        %676 = vmatprep.mubr.f32.mxu0 0.0
        %677 = vmatmul.mubr.f32.gmra.mrb[0].mxu0 %v508
        %v678 = vpop.f32.mrb[0].mxu0
        %v679 = vadd.f32 %v493, %v678
        %v680 = vpop.f32.mrb[0].mxu0
        %681 = vmatprep.mubr.f32.mxu0 0.0
        %682 = vmatmul.mubr.f32.gmra.mrb[0].mxu0 %v511
        %v683 = vpop.f32.mrb[0].mxu0
        %v684 = vadd.f32 %v498, %v683
        %v685 = vpop.f32.mrb[0].mxu0
        %686 = vdwg.mxu0
        %s687 = scalar_lea.vmem [#allocation5], 64
        %v688 = vld [vmem:[%s687] sm:$0xff]
        %v689 = vld [vmem:[%s687 + $0x8] sm:$0xff]
        %v690 = vld [vmem:[%s687 + $0x10] sm:$0xff]
        %v691 = vld [vmem:[%s687 + $0x18] sm:$0xff]
        %692 = vrot.lane.b32.xlu0 %v220, 126
        %v693 = vpop.permute.xlu0 %692
        %694 = vrot.lane.b32.xlu0 %v221, 126
        %v695 = vpop.permute.xlu0 %694
        %696 = vrot.lane.b32.xlu0 %v222, 126
        %v697 = vpop.permute.xlu0 %696
        %698 = vrot.lane.b32.xlu0 %v223, 126
        %v699 = vpop.permute.xlu0 %698
        %700 = vrot.lane.b32.xlu0 %v224, 126
        %v701 = vpop.permute.xlu0 %700
        %702 = vrot.lane.b32.xlu0 %v225, 126
        %v703 = vpop.permute.xlu0 %702
        %704 = vrot.lane.b32.xlu0 %v226, 126
        %v705 = vpop.permute.xlu0 %704
        %706 = vrot.lane.b32.xlu0 %v227, 126
        %v707 = vpop.permute.xlu0 %706
        %708 = vrot.lane.b32.xlu0 %v228, 126
        %v709 = vpop.permute.xlu0 %708
        %710 = vrot.lane.b32.xlu0 %v229, 126
        %v711 = vpop.permute.xlu0 %710
        %712 = vrot.lane.b32.xlu0 %v230, 126
        %v713 = vpop.permute.xlu0 %712
        %714 = vrot.lane.b32.xlu0 %v231, 126
        %v715 = vpop.permute.xlu0 %714
        %716 = vrot.lane.b32.xlu0 %v232, 126
        %v717 = vpop.permute.xlu0 %716
        %718 = vrot.lane.b32.xlu0 %v233, 126
        %v719 = vpop.permute.xlu0 %718
        %720 = vrot.lane.b32.xlu0 %v234, 126
        %v721 = vpop.permute.xlu0 %720
        %722 = vrot.lane.b32.xlu0 %v235, 126
        %v723 = vpop.permute.xlu0 %722
        %vm724 = vcmask 1031168
        %v725 = vsel %vm724, %v693, %v695
        %v726 = vsel %vm724, %v695, %v697
        %v727 = vsel %vm724, %v697, %v699
        %v728 = vsel %vm724, %v701, %v703
        %v729 = vsel %vm724, %v703, %v705
        %v730 = vsel %vm724, %v705, %v707
        %v731 = vsel %vm724, %v709, %v711
        %v732 = vsel %vm724, %v711, %v713
        %v733 = vsel %vm724, %v713, %v715
        %v734 = vsel %vm724, %v717, %v719
        %v735 = vsel %vm724, %v719, %v721
        %v736 = vsel %vm724, %v721, %v723
        %v750 = vsel %vm314, %v688, 0
        %v753 = vsel %vm314, %v689, 0
        %v756 = vsel %vm314, %v690, 0
        %v759 = vsel %vm314, %v691, 0
        %761 = vmatprep.subr.mxu0 %v726
        %762 = vmatpush1.msra.mxu0 %v725
        %763 = vmatprep.subr.mxu0 %v729
        %764 = vmatpush1.msra.mxu0 %v728
        %765 = vmatprep.subr.mxu0 %v732
        %766 = vmatpush1.msra.mxu0 %v731
        %767 = vmatprep.subr.mxu0 %v735
        %768 = vmatpush1.msra.mxu0 %v734
        %769 = vmatprep.subr.mxu0 0.0
        %770 = vmatpush1.msra.mxu0 0.0
        %771 = vmatprep.subr.mxu0 0.0
        %772 = vmatpush1.msra.mxu0 0.0
        %773 = vmatprep.subr.mxu0 0.0
        %774 = vmatpush1.msra.mxu0 0.0
        %775 = vmatprep.subr.mxu0 0.0
        %776 = vmatpush1.msra.mxu0 0.0
        %777 = vmatprep.subr.mxu0 0.0
        %778 = vmatpush1.msra.mxu0 0.0
        %779 = vmatprep.subr.mxu0 0.0
        %780 = vmatpush1.msra.mxu0 0.0
        %781 = vmatprep.subr.mxu0 0.0
        %782 = vmatpush1.msra.mxu0 0.0
        %783 = vmatprep.subr.mxu0 0.0
        %784 = vmatpush1.msra.mxu0 0.0
        %785 = vmatprep.subr.mxu0 0.0
        %786 = vmatpush1.msra.mxu0 0.0
        %787 = vmatprep.subr.mxu0 0.0
        %788 = vmatpush1.msra.mxu0 0.0
        %789 = vmatprep.subr.mxu0 0.0
        %790 = vmatpush1.msra.mxu0 0.0
        %791 = vmatprep.subr.mxu0 0.0
        %792 = vmatpush1.msra.mxu0 0.0
        %793 = vmatprep.subr.mxu0 0.0
        %794 = vmatpush1.msra.mxu0 0.0
        %795 = vmatprep.subr.mxu0 0.0
        %796 = vmatpush1.msra.mxu0 0.0
        %797 = vmatprep.subr.mxu0 0.0
        %798 = vmatpush1.msra.mxu0 0.0
        %799 = vmatprep.subr.mxu0 0.0
        %800 = vmatpush1.msra.mxu0 0.0
        %801 = vmatprep.subr.mxu0 0.0
        %802 = vmatpush1.msra.mxu0 0.0
        %803 = vmatprep.subr.mxu0 0.0
        %804 = vmatpush1.msra.mxu0 0.0
        %805 = vmatprep.subr.mxu0 0.0
        %806 = vmatpush1.msra.mxu0 0.0
        %807 = vmatprep.subr.mxu0 0.0
        %808 = vmatpush1.msra.mxu0 0.0
        %809 = vmatprep.subr.mxu0 0.0
        %810 = vmatpush1.msra.mxu0 0.0
        %811 = vmatprep.subr.mxu0 0.0
        %812 = vmatpush1.msra.mxu0 0.0
        %813 = vmatprep.subr.mxu0 0.0
        %814 = vmatpush1.msra.mxu0 0.0
        %815 = vmatprep.subr.mxu0 0.0
        %816 = vmatpush1.msra.mxu0 0.0
        %817 = vmatprep.subr.mxu0 0.0
        %818 = vmatpush1.msra.mxu0 0.0
        %819 = vmatprep.subr.mxu0 0.0
        %820 = vmatpush1.msra.mxu0 0.0
        %821 = vmatprep.subr.mxu0 0.0
        %822 = vmatpush1.msra.mxu0 0.0
        %823 = vmatprep.subr.mxu0 0.0
        %824 = vmatpush1.msra.mxu0 0.0
        %825 = vmatprep.mubr.f32.mxu0 0.0
        %826 = vmatmul.mubr.f32.gmra.mrb[0].mxu0 %v750
        %v827 = vpop.f32.mrb[0].mxu0
        %v828 = vadd.f32 0.0, %v827
        %v829 = vpop.f32.mrb[0].mxu0
        %v830 = vadd.f32 0.0, %v829
        %831 = vmatprep.mubr.f32.mxu0 0.0
        %832 = vmatmul.mubr.f32.gmra.mrb[0].mxu0 %v753
        %v833 = vpop.f32.mrb[0].mxu0
        %v834 = vadd.f32 0.0, %v833
        %v835 = vpop.f32.mrb[0].mxu0
        %v836 = vadd.f32 0.0, %v835
        %837 = vmatprep.mubr.f32.mxu0 0.0
        %838 = vmatmul.mubr.f32.gmra.mrb[0].mxu0 %v756
        %v839 = vpop.f32.mrb[0].mxu0
        %v840 = vadd.f32 0.0, %v839
        %v841 = vpop.f32.mrb[0].mxu0
        %v842 = vadd.f32 0.0, %v841
        %843 = vmatprep.mubr.f32.mxu0 0.0
        %844 = vmatmul.mubr.f32.gmra.mrb[0].mxu0 %v759
        %v845 = vpop.f32.mrb[0].mxu0
        %v846 = vadd.f32 0.0, %v845
        %v847 = vpop.f32.mrb[0].mxu0
        %v848 = vadd.f32 0.0, %v847
        %849 = vdwg.mxu0
        %850 = vmatprep.subr.mxu0 0.0
        %851 = vmatpush1.msra.mxu0 %v727
        %852 = vmatprep.subr.mxu0 0.0
        %853 = vmatpush1.msra.mxu0 %v730
        %854 = vmatprep.subr.mxu0 0.0
        %855 = vmatpush1.msra.mxu0 %v733
        %856 = vmatprep.subr.mxu0 0.0
        %857 = vmatpush1.msra.mxu0 %v736
        %858 = vmatprep.subr.mxu0 0.0
        %859 = vmatpush1.msra.mxu0 0.0
        %860 = vmatprep.subr.mxu0 0.0
        %861 = vmatpush1.msra.mxu0 0.0
        %862 = vmatprep.subr.mxu0 0.0
        %863 = vmatpush1.msra.mxu0 0.0
        %864 = vmatprep.subr.mxu0 0.0
        %865 = vmatpush1.msra.mxu0 0.0
        %866 = vmatprep.subr.mxu0 0.0
        %867 = vmatpush1.msra.mxu0 0.0
        %868 = vmatprep.subr.mxu0 0.0
        %869 = vmatpush1.msra.mxu0 0.0
        %870 = vmatprep.subr.mxu0 0.0
        %871 = vmatpush1.msra.mxu0 0.0
        %872 = vmatprep.subr.mxu0 0.0
        %873 = vmatpush1.msra.mxu0 0.0
        %874 = vmatprep.subr.mxu0 0.0
        %875 = vmatpush1.msra.mxu0 0.0
        %876 = vmatprep.subr.mxu0 0.0
        %877 = vmatpush1.msra.mxu0 0.0
        %878 = vmatprep.subr.mxu0 0.0
        %879 = vmatpush1.msra.mxu0 0.0
        %880 = vmatprep.subr.mxu0 0.0
        %881 = vmatpush1.msra.mxu0 0.0
        %882 = vmatprep.subr.mxu0 0.0
        %883 = vmatpush1.msra.mxu0 0.0
        %884 = vmatprep.subr.mxu0 0.0
        %885 = vmatpush1.msra.mxu0 0.0
        %886 = vmatprep.subr.mxu0 0.0
        %887 = vmatpush1.msra.mxu0 0.0
        %888 = vmatprep.subr.mxu0 0.0
        %889 = vmatpush1.msra.mxu0 0.0
        %890 = vmatprep.subr.mxu0 0.0
        %891 = vmatpush1.msra.mxu0 0.0
        %892 = vmatprep.subr.mxu0 0.0
        %893 = vmatpush1.msra.mxu0 0.0
        %894 = vmatprep.subr.mxu0 0.0
        %895 = vmatpush1.msra.mxu0 0.0
        %896 = vmatprep.subr.mxu0 0.0
        %897 = vmatpush1.msra.mxu0 0.0
        %898 = vmatprep.subr.mxu0 0.0
        %899 = vmatpush1.msra.mxu0 0.0
        %900 = vmatprep.subr.mxu0 0.0
        %901 = vmatpush1.msra.mxu0 0.0
        %902 = vmatprep.subr.mxu0 0.0
        %903 = vmatpush1.msra.mxu0 0.0
        %904 = vmatprep.subr.mxu0 0.0
        %905 = vmatpush1.msra.mxu0 0.0
        %906 = vmatprep.subr.mxu0 0.0
        %907 = vmatpush1.msra.mxu0 0.0
        %908 = vmatprep.subr.mxu0 0.0
        %909 = vmatpush1.msra.mxu0 0.0
        %910 = vmatprep.subr.mxu0 0.0
        %911 = vmatpush1.msra.mxu0 0.0
        %912 = vmatprep.subr.mxu0 0.0
        %913 = vmatpush1.msra.mxu0 0.0
        %914 = vmatprep.mubr.f32.mxu0 0.0
        %915 = vmatmul.mubr.f32.gmra.mrb[0].mxu0 %v750
        %v916 = vpop.f32.mrb[0].mxu0
        %v917 = vadd.f32 0.0, %v916
        %v918 = vpop.f32.mrb[0].mxu0
        %919 = vmatprep.mubr.f32.mxu0 0.0
        %920 = vmatmul.mubr.f32.gmra.mrb[0].mxu0 %v753
        %v921 = vpop.f32.mrb[0].mxu0
        %v922 = vadd.f32 0.0, %v921
        %v923 = vpop.f32.mrb[0].mxu0
        %924 = vmatprep.mubr.f32.mxu0 0.0
        %925 = vmatmul.mubr.f32.gmra.mrb[0].mxu0 %v756
        %v926 = vpop.f32.mrb[0].mxu0
        %v927 = vadd.f32 0.0, %v926
        %v928 = vpop.f32.mrb[0].mxu0
        %929 = vmatprep.mubr.f32.mxu0 0.0
        %930 = vmatmul.mubr.f32.gmra.mrb[0].mxu0 %v759
        %v931 = vpop.f32.mrb[0].mxu0
        %v932 = vadd.f32 0.0, %v931
        %v933 = vpop.f32.mrb[0].mxu0
        %934 = vdwg.mxu0
        %v935 = vadd.f32 %v580, %v828
        %v936 = vadd.f32 %v582, %v830
        %v937 = vadd.f32 %v669, %v917
        %v938 = vadd.f32 %v586, %v834
        %v939 = vadd.f32 %v588, %v836
        %v940 = vadd.f32 %v674, %v922
        %v941 = vadd.f32 %v592, %v840
        %v942 = vadd.f32 %v594, %v842
        %v943 = vadd.f32 %v679, %v927
        %v944 = vadd.f32 %v598, %v846
        %v945 = vadd.f32 %v600, %v848
        %v946 = vadd.f32 %v684, %v932
        %s947 = scalar_lea.vmem [#allocation5], 96
        %v948 = vld [vmem:[%s947] sm:$0xff]
        %v949 = vld [vmem:[%s947 + $0x8] sm:$0xff]
        %v950 = vld [vmem:[%s947 + $0x10] sm:$0xff]
        %v951 = vld [vmem:[%s947 + $0x18] sm:$0xff]
        %952 = vrot.lane.b32.xlu0 %v220, 110
        %v953 = vpop.permute.xlu0 %952
        %954 = vrot.lane.b32.xlu0 %v221, 110
        %v955 = vpop.permute.xlu0 %954
        %956 = vrot.lane.b32.xlu0 %v222, 110
        %v957 = vpop.permute.xlu0 %956
        %958 = vrot.lane.b32.xlu0 %v223, 110
        %v959 = vpop.permute.xlu0 %958
        %960 = vrot.lane.b32.xlu0 %v224, 110
        %v961 = vpop.permute.xlu0 %960
        %962 = vrot.lane.b32.xlu0 %v225, 110
        %v963 = vpop.permute.xlu0 %962
        %964 = vrot.lane.b32.xlu0 %v226, 110
        %v965 = vpop.permute.xlu0 %964
        %966 = vrot.lane.b32.xlu0 %v227, 110
        %v967 = vpop.permute.xlu0 %966
        %968 = vrot.lane.b32.xlu0 %v228, 110
        %v969 = vpop.permute.xlu0 %968
        %970 = vrot.lane.b32.xlu0 %v229, 110
        %v971 = vpop.permute.xlu0 %970
        %972 = vrot.lane.b32.xlu0 %v230, 110
        %v973 = vpop.permute.xlu0 %972
        %974 = vrot.lane.b32.xlu0 %v231, 110
        %v975 = vpop.permute.xlu0 %974
        %976 = vrot.lane.b32.xlu0 %v232, 110
        %v977 = vpop.permute.xlu0 %976
        %978 = vrot.lane.b32.xlu0 %v233, 110
        %v979 = vpop.permute.xlu0 %978
        %980 = vrot.lane.b32.xlu0 %v234, 110
        %v981 = vpop.permute.xlu0 %980
        %982 = vrot.lane.b32.xlu0 %v235, 110
        %v983 = vpop.permute.xlu0 %982
        %vm984 = vcmask 900096
        %v985 = vsel %vm984, %v953, %v955
        %v986 = vsel %vm984, %v955, %v957
        %v987 = vsel %vm984, %v957, %v959
        %v988 = vsel %vm984, %v961, %v963
        %v989 = vsel %vm984, %v963, %v965
        %v990 = vsel %vm984, %v965, %v967
        %v991 = vsel %vm984, %v969, %v971
        %v992 = vsel %vm984, %v971, %v973
        %v993 = vsel %vm984, %v973, %v975
        %v994 = vsel %vm984, %v977, %v979
        %v995 = vsel %vm984, %v979, %v981
        %v996 = vsel %vm984, %v981, %v983
        %v1010 = vsel %vm314, %v948, 0
        %v1013 = vsel %vm314, %v949, 0
        %v1016 = vsel %vm314, %v950, 0
        %v1019 = vsel %vm314, %v951, 0
        %1021 = vmatprep.subr.mxu0 %v986
        %1022 = vmatpush1.msra.mxu0 %v985
        %1023 = vmatprep.subr.mxu0 %v989
        %1024 = vmatpush1.msra.mxu0 %v988
        %1025 = vmatprep.subr.mxu0 %v992
        %1026 = vmatpush1.msra.mxu0 %v991
        %1027 = vmatprep.subr.mxu0 %v995
        %1028 = vmatpush1.msra.mxu0 %v994
        %1029 = vmatprep.subr.mxu0 0.0
        %1030 = vmatpush1.msra.mxu0 0.0
        %1031 = vmatprep.subr.mxu0 0.0
        %1032 = vmatpush1.msra.mxu0 0.0
        %1033 = vmatprep.subr.mxu0 0.0
        %1034 = vmatpush1.msra.mxu0 0.0
        %1035 = vmatprep.subr.mxu0 0.0
        %1036 = vmatpush1.msra.mxu0 0.0
        %1037 = vmatprep.subr.mxu0 0.0
        %1038 = vmatpush1.msra.mxu0 0.0
        %1039 = vmatprep.subr.mxu0 0.0
        %1040 = vmatpush1.msra.mxu0 0.0
        %1041 = vmatprep.subr.mxu0 0.0
        %1042 = vmatpush1.msra.mxu0 0.0
        %1043 = vmatprep.subr.mxu0 0.0
        %1044 = vmatpush1.msra.mxu0 0.0
        %1045 = vmatprep.subr.mxu0 0.0
        %1046 = vmatpush1.msra.mxu0 0.0
        %1047 = vmatprep.subr.mxu0 0.0
        %1048 = vmatpush1.msra.mxu0 0.0
        %1049 = vmatprep.subr.mxu0 0.0
        %1050 = vmatpush1.msra.mxu0 0.0
        %1051 = vmatprep.subr.mxu0 0.0
        %1052 = vmatpush1.msra.mxu0 0.0
        %1053 = vmatprep.subr.mxu0 0.0
        %1054 = vmatpush1.msra.mxu0 0.0
        %1055 = vmatprep.subr.mxu0 0.0
        %1056 = vmatpush1.msra.mxu0 0.0
        %1057 = vmatprep.subr.mxu0 0.0
        %1058 = vmatpush1.msra.mxu0 0.0
        %1059 = vmatprep.subr.mxu0 0.0
        %1060 = vmatpush1.msra.mxu0 0.0
        %1061 = vmatprep.subr.mxu0 0.0
        %1062 = vmatpush1.msra.mxu0 0.0
        %1063 = vmatprep.subr.mxu0 0.0
        %1064 = vmatpush1.msra.mxu0 0.0
        %1065 = vmatprep.subr.mxu0 0.0
        %1066 = vmatpush1.msra.mxu0 0.0
        %1067 = vmatprep.subr.mxu0 0.0
        %1068 = vmatpush1.msra.mxu0 0.0
        %1069 = vmatprep.subr.mxu0 0.0
        %1070 = vmatpush1.msra.mxu0 0.0
        %1071 = vmatprep.subr.mxu0 0.0
        %1072 = vmatpush1.msra.mxu0 0.0
        %1073 = vmatprep.subr.mxu0 0.0
        %1074 = vmatpush1.msra.mxu0 0.0
        %1075 = vmatprep.subr.mxu0 0.0
        %1076 = vmatpush1.msra.mxu0 0.0
        %1077 = vmatprep.subr.mxu0 0.0
        %1078 = vmatpush1.msra.mxu0 0.0
        %1079 = vmatprep.subr.mxu0 0.0
        %1080 = vmatpush1.msra.mxu0 0.0
        %1081 = vmatprep.subr.mxu0 0.0
        %1082 = vmatpush1.msra.mxu0 0.0
        %1083 = vmatprep.subr.mxu0 0.0
        %1084 = vmatpush1.msra.mxu0 0.0
        %1085 = vmatprep.mubr.f32.mxu0 0.0
        %1086 = vmatmul.mubr.f32.gmra.mrb[0].mxu0 %v1010
        %v1087 = vpop.f32.mrb[0].mxu0
        %v1088 = vadd.f32 0.0, %v1087
        %v1089 = vpop.f32.mrb[0].mxu0
        %v1090 = vadd.f32 0.0, %v1089
        %1091 = vmatprep.mubr.f32.mxu0 0.0
        %1092 = vmatmul.mubr.f32.gmra.mrb[0].mxu0 %v1013
        %v1093 = vpop.f32.mrb[0].mxu0
        %v1094 = vadd.f32 0.0, %v1093
        %v1095 = vpop.f32.mrb[0].mxu0
        %v1096 = vadd.f32 0.0, %v1095
        %1097 = vmatprep.mubr.f32.mxu0 0.0
        %1098 = vmatmul.mubr.f32.gmra.mrb[0].mxu0 %v1016
        %v1099 = vpop.f32.mrb[0].mxu0
        %v1100 = vadd.f32 0.0, %v1099
        %v1101 = vpop.f32.mrb[0].mxu0
        %v1102 = vadd.f32 0.0, %v1101
        %1103 = vmatprep.mubr.f32.mxu0 0.0
        %1104 = vmatmul.mubr.f32.gmra.mrb[0].mxu0 %v1019
        %v1105 = vpop.f32.mrb[0].mxu0
        %v1106 = vadd.f32 0.0, %v1105
        %v1107 = vpop.f32.mrb[0].mxu0
        %v1108 = vadd.f32 0.0, %v1107
        %1109 = vdwg.mxu0
        %1110 = vmatprep.subr.mxu0 0.0
        %1111 = vmatpush1.msra.mxu0 %v987
        %1112 = vmatprep.subr.mxu0 0.0
        %1113 = vmatpush1.msra.mxu0 %v990
        %1114 = vmatprep.subr.mxu0 0.0
        %1115 = vmatpush1.msra.mxu0 %v993
        %1116 = vmatprep.subr.mxu0 0.0
        %1117 = vmatpush1.msra.mxu0 %v996
        %1118 = vmatprep.subr.mxu0 0.0
        %1119 = vmatpush1.msra.mxu0 0.0
        %1120 = vmatprep.subr.mxu0 0.0
        %1121 = vmatpush1.msra.mxu0 0.0
        %1122 = vmatprep.subr.mxu0 0.0
        %1123 = vmatpush1.msra.mxu0 0.0
        %1124 = vmatprep.subr.mxu0 0.0
        %1125 = vmatpush1.msra.mxu0 0.0
        %1126 = vmatprep.subr.mxu0 0.0
        %1127 = vmatpush1.msra.mxu0 0.0
        %1128 = vmatprep.subr.mxu0 0.0
        %1129 = vmatpush1.msra.mxu0 0.0
        %1130 = vmatprep.subr.mxu0 0.0
        %1131 = vmatpush1.msra.mxu0 0.0
        %1132 = vmatprep.subr.mxu0 0.0
        %1133 = vmatpush1.msra.mxu0 0.0
        %1134 = vmatprep.subr.mxu0 0.0
        %1135 = vmatpush1.msra.mxu0 0.0
        %1136 = vmatprep.subr.mxu0 0.0
        %1137 = vmatpush1.msra.mxu0 0.0
        %1138 = vmatprep.subr.mxu0 0.0
        %1139 = vmatpush1.msra.mxu0 0.0
        %1140 = vmatprep.subr.mxu0 0.0
        %1141 = vmatpush1.msra.mxu0 0.0
        %1142 = vmatprep.subr.mxu0 0.0
        %1143 = vmatpush1.msra.mxu0 0.0
        %1144 = vmatprep.subr.mxu0 0.0
        %1145 = vmatpush1.msra.mxu0 0.0
        %1146 = vmatprep.subr.mxu0 0.0
        %1147 = vmatpush1.msra.mxu0 0.0
        %1148 = vmatprep.subr.mxu0 0.0
        %1149 = vmatpush1.msra.mxu0 0.0
        %1150 = vmatprep.subr.mxu0 0.0
        %1151 = vmatpush1.msra.mxu0 0.0
        %1152 = vmatprep.subr.mxu0 0.0
        %1153 = vmatpush1.msra.mxu0 0.0
        %1154 = vmatprep.subr.mxu0 0.0
        %1155 = vmatpush1.msra.mxu0 0.0
        %1156 = vmatprep.subr.mxu0 0.0
        %1157 = vmatpush1.msra.mxu0 0.0
        %1158 = vmatprep.subr.mxu0 0.0
        %1159 = vmatpush1.msra.mxu0 0.0
        %1160 = vmatprep.subr.mxu0 0.0
        %1161 = vmatpush1.msra.mxu0 0.0
        %1162 = vmatprep.subr.mxu0 0.0
        %1163 = vmatpush1.msra.mxu0 0.0
        %1164 = vmatprep.subr.mxu0 0.0
        %1165 = vmatpush1.msra.mxu0 0.0
        %1166 = vmatprep.subr.mxu0 0.0
        %1167 = vmatpush1.msra.mxu0 0.0
        %1168 = vmatprep.subr.mxu0 0.0
        %1169 = vmatpush1.msra.mxu0 0.0
        %1170 = vmatprep.subr.mxu0 0.0
        %1171 = vmatpush1.msra.mxu0 0.0
        %1172 = vmatprep.subr.mxu0 0.0
        %1173 = vmatpush1.msra.mxu0 0.0
        %1174 = vmatprep.mubr.f32.mxu0 0.0
        %1175 = vmatmul.mubr.f32.gmra.mrb[0].mxu0 %v1010
        %v1176 = vpop.f32.mrb[0].mxu0
        %v1177 = vadd.f32 0.0, %v1176
        %v1178 = vpop.f32.mrb[0].mxu0
        %1179 = vmatprep.mubr.f32.mxu0 0.0
        %1180 = vmatmul.mubr.f32.gmra.mrb[0].mxu0 %v1013
        %v1181 = vpop.f32.mrb[0].mxu0
        %v1182 = vadd.f32 0.0, %v1181
        %v1183 = vpop.f32.mrb[0].mxu0
        %1184 = vmatprep.mubr.f32.mxu0 0.0
        %1185 = vmatmul.mubr.f32.gmra.mrb[0].mxu0 %v1016
        %v1186 = vpop.f32.mrb[0].mxu0
        %v1187 = vadd.f32 0.0, %v1186
        %v1188 = vpop.f32.mrb[0].mxu0
        %1189 = vmatprep.mubr.f32.mxu0 0.0
        %1190 = vmatmul.mubr.f32.gmra.mrb[0].mxu0 %v1019
        %v1191 = vpop.f32.mrb[0].mxu0
        %v1192 = vadd.f32 0.0, %v1191
        %v1193 = vpop.f32.mrb[0].mxu0
        %1194 = vdwg.mxu0
        %v1195 = vadd.f32 %v935, %v1088
        %v1196 = vadd.f32 %v936, %v1090
        %v1197 = vadd.f32 %v937, %v1177
        %v1198 = vadd.f32 %v938, %v1094
        %v1199 = vadd.f32 %v939, %v1096
        %v1200 = vadd.f32 %v940, %v1182
        %v1201 = vadd.f32 %v941, %v1100
        %v1202 = vadd.f32 %v942, %v1102
        %v1203 = vadd.f32 %v943, %v1187
        %v1204 = vadd.f32 %v944, %v1106
        %v1205 = vadd.f32 %v945, %v1108
        %v1206 = vadd.f32 %v946, %v1192
        %s1207 = scalar_lea.vmem [#allocation5], 128
        %v1208 = vld [vmem:[%s1207] sm:$0xff]
        %v1209 = vld [vmem:[%s1207 + $0x8] sm:$0xff]
        %v1210 = vld [vmem:[%s1207 + $0x10] sm:$0xff]
        %v1211 = vld [vmem:[%s1207 + $0x18] sm:$0xff]
        %1212 = vrot.lane.b32.xlu0 %v220, 109
        %v1213 = vpop.permute.xlu0 %1212
        %1214 = vrot.lane.b32.xlu0 %v221, 109
        %v1215 = vpop.permute.xlu0 %1214
        %1216 = vrot.lane.b32.xlu0 %v222, 109
        %v1217 = vpop.permute.xlu0 %1216
        %1218 = vrot.lane.b32.xlu0 %v223, 109
        %v1219 = vpop.permute.xlu0 %1218
        %1220 = vrot.lane.b32.xlu0 %v224, 109
        %v1221 = vpop.permute.xlu0 %1220
        %1222 = vrot.lane.b32.xlu0 %v225, 109
        %v1223 = vpop.permute.xlu0 %1222
        %1224 = vrot.lane.b32.xlu0 %v226, 109
        %v1225 = vpop.permute.xlu0 %1224
        %1226 = vrot.lane.b32.xlu0 %v227, 109
        %v1227 = vpop.permute.xlu0 %1226
        %1228 = vrot.lane.b32.xlu0 %v228, 109
        %v1229 = vpop.permute.xlu0 %1228
        %1230 = vrot.lane.b32.xlu0 %v229, 109
        %v1231 = vpop.permute.xlu0 %1230
        %1232 = vrot.lane.b32.xlu0 %v230, 109
        %v1233 = vpop.permute.xlu0 %1232
        %1234 = vrot.lane.b32.xlu0 %v231, 109
        %v1235 = vpop.permute.xlu0 %1234
        %1236 = vrot.lane.b32.xlu0 %v232, 109
        %v1237 = vpop.permute.xlu0 %1236
        %1238 = vrot.lane.b32.xlu0 %v233, 109
        %v1239 = vpop.permute.xlu0 %1238
        %1240 = vrot.lane.b32.xlu0 %v234, 109
        %v1241 = vpop.permute.xlu0 %1240
        %1242 = vrot.lane.b32.xlu0 %v235, 109
        %v1243 = vpop.permute.xlu0 %1242
        %vm1244 = vcmask 891904
        %v1245 = vsel %vm1244, %v1213, %v1215
        %v1246 = vsel %vm1244, %v1215, %v1217
        %v1247 = vsel %vm1244, %v1217, %v1219
        %v1248 = vsel %vm1244, %v1221, %v1223
        %v1249 = vsel %vm1244, %v1223, %v1225
        %v1250 = vsel %vm1244, %v1225, %v1227
        %v1251 = vsel %vm1244, %v1229, %v1231
        %v1252 = vsel %vm1244, %v1231, %v1233
        %v1253 = vsel %vm1244, %v1233, %v1235
        %v1254 = vsel %vm1244, %v1237, %v1239
        %v1255 = vsel %vm1244, %v1239, %v1241
        %v1256 = vsel %vm1244, %v1241, %v1243
        %v1270 = vsel %vm314, %v1208, 0
        %v1273 = vsel %vm314, %v1209, 0
        %v1276 = vsel %vm314, %v1210, 0
        %v1279 = vsel %vm314, %v1211, 0
        %1281 = vmatprep.subr.mxu0 %v1246
        %1282 = vmatpush1.msra.mxu0 %v1245
        %1283 = vmatprep.subr.mxu0 %v1249
        %1284 = vmatpush1.msra.mxu0 %v1248
        %1285 = vmatprep.subr.mxu0 %v1252
        %1286 = vmatpush1.msra.mxu0 %v1251
        %1287 = vmatprep.subr.mxu0 %v1255
        %1288 = vmatpush1.msra.mxu0 %v1254
        %1289 = vmatprep.subr.mxu0 0.0
        %1290 = vmatpush1.msra.mxu0 0.0
        %1291 = vmatprep.subr.mxu0 0.0
        %1292 = vmatpush1.msra.mxu0 0.0
        %1293 = vmatprep.subr.mxu0 0.0
        %1294 = vmatpush1.msra.mxu0 0.0
        %1295 = vmatprep.subr.mxu0 0.0
        %1296 = vmatpush1.msra.mxu0 0.0
        %1297 = vmatprep.subr.mxu0 0.0
        %1298 = vmatpush1.msra.mxu0 0.0
        %1299 = vmatprep.subr.mxu0 0.0
        %1300 = vmatpush1.msra.mxu0 0.0
        %1301 = vmatprep.subr.mxu0 0.0
        %1302 = vmatpush1.msra.mxu0 0.0
        %1303 = vmatprep.subr.mxu0 0.0
        %1304 = vmatpush1.msra.mxu0 0.0
        %1305 = vmatprep.subr.mxu0 0.0
        %1306 = vmatpush1.msra.mxu0 0.0
        %1307 = vmatprep.subr.mxu0 0.0
        %1308 = vmatpush1.msra.mxu0 0.0
        %1309 = vmatprep.subr.mxu0 0.0
        %1310 = vmatpush1.msra.mxu0 0.0
        %1311 = vmatprep.subr.mxu0 0.0
        %1312 = vmatpush1.msra.mxu0 0.0
        %1313 = vmatprep.subr.mxu0 0.0
        %1314 = vmatpush1.msra.mxu0 0.0
        %1315 = vmatprep.subr.mxu0 0.0
        %1316 = vmatpush1.msra.mxu0 0.0
        %1317 = vmatprep.subr.mxu0 0.0
        %1318 = vmatpush1.msra.mxu0 0.0
        %1319 = vmatprep.subr.mxu0 0.0
        %1320 = vmatpush1.msra.mxu0 0.0
        %1321 = vmatprep.subr.mxu0 0.0
        %1322 = vmatpush1.msra.mxu0 0.0
        %1323 = vmatprep.subr.mxu0 0.0
        %1324 = vmatpush1.msra.mxu0 0.0
        %1325 = vmatprep.subr.mxu0 0.0
        %1326 = vmatpush1.msra.mxu0 0.0
        %1327 = vmatprep.subr.mxu0 0.0
        %1328 = vmatpush1.msra.mxu0 0.0
        %1329 = vmatprep.subr.mxu0 0.0
        %1330 = vmatpush1.msra.mxu0 0.0
        %1331 = vmatprep.subr.mxu0 0.0
        %1332 = vmatpush1.msra.mxu0 0.0
        %1333 = vmatprep.subr.mxu0 0.0
        %1334 = vmatpush1.msra.mxu0 0.0
        %1335 = vmatprep.subr.mxu0 0.0
        %1336 = vmatpush1.msra.mxu0 0.0
        %1337 = vmatprep.subr.mxu0 0.0
        %1338 = vmatpush1.msra.mxu0 0.0
        %1339 = vmatprep.subr.mxu0 0.0
        %1340 = vmatpush1.msra.mxu0 0.0
        %1341 = vmatprep.subr.mxu0 0.0
        %1342 = vmatpush1.msra.mxu0 0.0
        %1343 = vmatprep.subr.mxu0 0.0
        %1344 = vmatpush1.msra.mxu0 0.0
        %1345 = vmatprep.mubr.f32.mxu0 0.0
        %1346 = vmatmul.mubr.f32.gmra.mrb[0].mxu0 %v1270
        %v1347 = vpop.f32.mrb[0].mxu0
        %v1348 = vadd.f32 0.0, %v1347
        %v1349 = vpop.f32.mrb[0].mxu0
        %v1350 = vadd.f32 0.0, %v1349
        %1351 = vmatprep.mubr.f32.mxu0 0.0
        %1352 = vmatmul.mubr.f32.gmra.mrb[0].mxu0 %v1273
        %v1353 = vpop.f32.mrb[0].mxu0
        %v1354 = vadd.f32 0.0, %v1353
        %v1355 = vpop.f32.mrb[0].mxu0
        %v1356 = vadd.f32 0.0, %v1355
        %1357 = vmatprep.mubr.f32.mxu0 0.0
        %1358 = vmatmul.mubr.f32.gmra.mrb[0].mxu0 %v1276
        %v1359 = vpop.f32.mrb[0].mxu0
        %v1360 = vadd.f32 0.0, %v1359
        %v1361 = vpop.f32.mrb[0].mxu0
        %v1362 = vadd.f32 0.0, %v1361
        %1363 = vmatprep.mubr.f32.mxu0 0.0
        %1364 = vmatmul.mubr.f32.gmra.mrb[0].mxu0 %v1279
        %v1365 = vpop.f32.mrb[0].mxu0
        %v1366 = vadd.f32 0.0, %v1365
        %v1367 = vpop.f32.mrb[0].mxu0
        %v1368 = vadd.f32 0.0, %v1367
        %1369 = vdwg.mxu0
        %1370 = vmatprep.subr.mxu0 0.0
        %1371 = vmatpush1.msra.mxu0 %v1247
        %1372 = vmatprep.subr.mxu0 0.0
        %1373 = vmatpush1.msra.mxu0 %v1250
        %1374 = vmatprep.subr.mxu0 0.0
        %1375 = vmatpush1.msra.mxu0 %v1253
        %1376 = vmatprep.subr.mxu0 0.0
        %1377 = vmatpush1.msra.mxu0 %v1256
        %1378 = vmatprep.subr.mxu0 0.0
        %1379 = vmatpush1.msra.mxu0 0.0
        %1380 = vmatprep.subr.mxu0 0.0
        %1381 = vmatpush1.msra.mxu0 0.0
        %1382 = vmatprep.subr.mxu0 0.0
        %1383 = vmatpush1.msra.mxu0 0.0
        %1384 = vmatprep.subr.mxu0 0.0
        %1385 = vmatpush1.msra.mxu0 0.0
        %1386 = vmatprep.subr.mxu0 0.0
        %1387 = vmatpush1.msra.mxu0 0.0
        %1388 = vmatprep.subr.mxu0 0.0
        %1389 = vmatpush1.msra.mxu0 0.0
        %1390 = vmatprep.subr.mxu0 0.0
        %1391 = vmatpush1.msra.mxu0 0.0
        %1392 = vmatprep.subr.mxu0 0.0
        %1393 = vmatpush1.msra.mxu0 0.0
        %1394 = vmatprep.subr.mxu0 0.0
        %1395 = vmatpush1.msra.mxu0 0.0
        %1396 = vmatprep.subr.mxu0 0.0
        %1397 = vmatpush1.msra.mxu0 0.0
        %1398 = vmatprep.subr.mxu0 0.0
        %1399 = vmatpush1.msra.mxu0 0.0
        %1400 = vmatprep.subr.mxu0 0.0
        %1401 = vmatpush1.msra.mxu0 0.0
        %1402 = vmatprep.subr.mxu0 0.0
        %1403 = vmatpush1.msra.mxu0 0.0
        %1404 = vmatprep.subr.mxu0 0.0
        %1405 = vmatpush1.msra.mxu0 0.0
        %1406 = vmatprep.subr.mxu0 0.0
        %1407 = vmatpush1.msra.mxu0 0.0
        %1408 = vmatprep.subr.mxu0 0.0
        %1409 = vmatpush1.msra.mxu0 0.0
        %1410 = vmatprep.subr.mxu0 0.0
        %1411 = vmatpush1.msra.mxu0 0.0
        %1412 = vmatprep.subr.mxu0 0.0
        %1413 = vmatpush1.msra.mxu0 0.0
        %1414 = vmatprep.subr.mxu0 0.0
        %1415 = vmatpush1.msra.mxu0 0.0
        %1416 = vmatprep.subr.mxu0 0.0
        %1417 = vmatpush1.msra.mxu0 0.0
        %1418 = vmatprep.subr.mxu0 0.0
        %1419 = vmatpush1.msra.mxu0 0.0
        %1420 = vmatprep.subr.mxu0 0.0
        %1421 = vmatpush1.msra.mxu0 0.0
        %1422 = vmatprep.subr.mxu0 0.0
        %1423 = vmatpush1.msra.mxu0 0.0
        %1424 = vmatprep.subr.mxu0 0.0
        %1425 = vmatpush1.msra.mxu0 0.0
        %1426 = vmatprep.subr.mxu0 0.0
        %1427 = vmatpush1.msra.mxu0 0.0
        %1428 = vmatprep.subr.mxu0 0.0
        %1429 = vmatpush1.msra.mxu0 0.0
        %1430 = vmatprep.subr.mxu0 0.0
        %1431 = vmatpush1.msra.mxu0 0.0
        %1432 = vmatprep.subr.mxu0 0.0
        %1433 = vmatpush1.msra.mxu0 0.0
        %1434 = vmatprep.mubr.f32.mxu0 0.0
        %1435 = vmatmul.mubr.f32.gmra.mrb[0].mxu0 %v1270
        %v1436 = vpop.f32.mrb[0].mxu0
        %v1437 = vadd.f32 0.0, %v1436
        %v1438 = vpop.f32.mrb[0].mxu0
        %1439 = vmatprep.mubr.f32.mxu0 0.0
        %1440 = vmatmul.mubr.f32.gmra.mrb[0].mxu0 %v1273
        %v1441 = vpop.f32.mrb[0].mxu0
        %v1442 = vadd.f32 0.0, %v1441
        %v1443 = vpop.f32.mrb[0].mxu0
        %1444 = vmatprep.mubr.f32.mxu0 0.0
        %1445 = vmatmul.mubr.f32.gmra.mrb[0].mxu0 %v1276
        %v1446 = vpop.f32.mrb[0].mxu0
        %v1447 = vadd.f32 0.0, %v1446
        %v1448 = vpop.f32.mrb[0].mxu0
        %1449 = vmatprep.mubr.f32.mxu0 0.0
        %1450 = vmatmul.mubr.f32.gmra.mrb[0].mxu0 %v1279
        %v1451 = vpop.f32.mrb[0].mxu0
        %v1452 = vadd.f32 0.0, %v1451
        %v1453 = vpop.f32.mrb[0].mxu0
        %1454 = vdwg.mxu0
        %v1455 = vadd.f32 %v1195, %v1348
        %v1456 = vadd.f32 %v1196, %v1350
        %v1457 = vadd.f32 %v1197, %v1437
        %v1458 = vadd.f32 %v1198, %v1354
        %v1459 = vadd.f32 %v1199, %v1356
        %v1460 = vadd.f32 %v1200, %v1442
        %v1461 = vadd.f32 %v1201, %v1360
        %v1462 = vadd.f32 %v1202, %v1362
        %v1463 = vadd.f32 %v1203, %v1447
        %v1464 = vadd.f32 %v1204, %v1366
        %v1465 = vadd.f32 %v1205, %v1368
        %v1466 = vadd.f32 %v1206, %v1452
        %s1467 = scalar_lea.vmem [#allocation5], 160
        %v1468 = vld [vmem:[%s1467] sm:$0xff]
        %v1469 = vld [vmem:[%s1467 + $0x8] sm:$0xff]
        %v1470 = vld [vmem:[%s1467 + $0x10] sm:$0xff]
        %v1471 = vld [vmem:[%s1467 + $0x18] sm:$0xff]
        %1472 = vrot.lane.b32.xlu0 %v220, 108
        %v1473 = vpop.permute.xlu0 %1472
        %1474 = vrot.lane.b32.xlu0 %v221, 108
        %v1475 = vpop.permute.xlu0 %1474
        %1476 = vrot.lane.b32.xlu0 %v222, 108
        %v1477 = vpop.permute.xlu0 %1476
        %1478 = vrot.lane.b32.xlu0 %v223, 108
        %v1479 = vpop.permute.xlu0 %1478
        %1480 = vrot.lane.b32.xlu0 %v224, 108
        %v1481 = vpop.permute.xlu0 %1480
        %1482 = vrot.lane.b32.xlu0 %v225, 108
        %v1483 = vpop.permute.xlu0 %1482
        %1484 = vrot.lane.b32.xlu0 %v226, 108
        %v1485 = vpop.permute.xlu0 %1484
        %1486 = vrot.lane.b32.xlu0 %v227, 108
        %v1487 = vpop.permute.xlu0 %1486
        %1488 = vrot.lane.b32.xlu0 %v228, 108
        %v1489 = vpop.permute.xlu0 %1488
        %1490 = vrot.lane.b32.xlu0 %v229, 108
        %v1491 = vpop.permute.xlu0 %1490
        %1492 = vrot.lane.b32.xlu0 %v230, 108
        %v1493 = vpop.permute.xlu0 %1492
        %1494 = vrot.lane.b32.xlu0 %v231, 108
        %v1495 = vpop.permute.xlu0 %1494
        %1496 = vrot.lane.b32.xlu0 %v232, 108
        %v1497 = vpop.permute.xlu0 %1496
        %1498 = vrot.lane.b32.xlu0 %v233, 108
        %v1499 = vpop.permute.xlu0 %1498
        %1500 = vrot.lane.b32.xlu0 %v234, 108
        %v1501 = vpop.permute.xlu0 %1500
        %1502 = vrot.lane.b32.xlu0 %v235, 108
        %v1503 = vpop.permute.xlu0 %1502
        %vm1504 = vcmask 883712
        %v1505 = vsel %vm1504, %v1473, %v1475
        %v1506 = vsel %vm1504, %v1475, %v1477
        %v1507 = vsel %vm1504, %v1477, %v1479
        %v1508 = vsel %vm1504, %v1481, %v1483
        %v1509 = vsel %vm1504, %v1483, %v1485
        %v1510 = vsel %vm1504, %v1485, %v1487
        %v1511 = vsel %vm1504, %v1489, %v1491
        %v1512 = vsel %vm1504, %v1491, %v1493
        %v1513 = vsel %vm1504, %v1493, %v1495
        %v1514 = vsel %vm1504, %v1497, %v1499
        %v1515 = vsel %vm1504, %v1499, %v1501
        %v1516 = vsel %vm1504, %v1501, %v1503
        %v1530 = vsel %vm314, %v1468, 0
        %v1533 = vsel %vm314, %v1469, 0
        %v1536 = vsel %vm314, %v1470, 0
        %v1539 = vsel %vm314, %v1471, 0
        %1541 = vmatprep.subr.mxu0 %v1506
        %1542 = vmatpush1.msra.mxu0 %v1505
        %1543 = vmatprep.subr.mxu0 %v1509
        %1544 = vmatpush1.msra.mxu0 %v1508
        %1545 = vmatprep.subr.mxu0 %v1512
        %1546 = vmatpush1.msra.mxu0 %v1511
        %1547 = vmatprep.subr.mxu0 %v1515
        %1548 = vmatpush1.msra.mxu0 %v1514
        %1549 = vmatprep.subr.mxu0 0.0
        %1550 = vmatpush1.msra.mxu0 0.0
        %1551 = vmatprep.subr.mxu0 0.0
        %1552 = vmatpush1.msra.mxu0 0.0
        %1553 = vmatprep.subr.mxu0 0.0
        %1554 = vmatpush1.msra.mxu0 0.0
        %1555 = vmatprep.subr.mxu0 0.0
        %1556 = vmatpush1.msra.mxu0 0.0
        %1557 = vmatprep.subr.mxu0 0.0
        %1558 = vmatpush1.msra.mxu0 0.0
        %1559 = vmatprep.subr.mxu0 0.0
        %1560 = vmatpush1.msra.mxu0 0.0
        %1561 = vmatprep.subr.mxu0 0.0
        %1562 = vmatpush1.msra.mxu0 0.0
        %1563 = vmatprep.subr.mxu0 0.0
        %1564 = vmatpush1.msra.mxu0 0.0
        %1565 = vmatprep.subr.mxu0 0.0
        %1566 = vmatpush1.msra.mxu0 0.0
        %1567 = vmatprep.subr.mxu0 0.0
        %1568 = vmatpush1.msra.mxu0 0.0
        %1569 = vmatprep.subr.mxu0 0.0
        %1570 = vmatpush1.msra.mxu0 0.0
        %1571 = vmatprep.subr.mxu0 0.0
        %1572 = vmatpush1.msra.mxu0 0.0
        %1573 = vmatprep.subr.mxu0 0.0
        %1574 = vmatpush1.msra.mxu0 0.0
        %1575 = vmatprep.subr.mxu0 0.0
        %1576 = vmatpush1.msra.mxu0 0.0
        %1577 = vmatprep.subr.mxu0 0.0
        %1578 = vmatpush1.msra.mxu0 0.0
        %1579 = vmatprep.subr.mxu0 0.0
        %1580 = vmatpush1.msra.mxu0 0.0
        %1581 = vmatprep.subr.mxu0 0.0
        %1582 = vmatpush1.msra.mxu0 0.0
        %1583 = vmatprep.subr.mxu0 0.0
        %1584 = vmatpush1.msra.mxu0 0.0
        %1585 = vmatprep.subr.mxu0 0.0
        %1586 = vmatpush1.msra.mxu0 0.0
        %1587 = vmatprep.subr.mxu0 0.0
        %1588 = vmatpush1.msra.mxu0 0.0
        %1589 = vmatprep.subr.mxu0 0.0
        %1590 = vmatpush1.msra.mxu0 0.0
        %1591 = vmatprep.subr.mxu0 0.0
        %1592 = vmatpush1.msra.mxu0 0.0
        %1593 = vmatprep.subr.mxu0 0.0
        %1594 = vmatpush1.msra.mxu0 0.0
        %1595 = vmatprep.subr.mxu0 0.0
        %1596 = vmatpush1.msra.mxu0 0.0
        %1597 = vmatprep.subr.mxu0 0.0
        %1598 = vmatpush1.msra.mxu0 0.0
        %1599 = vmatprep.subr.mxu0 0.0
        %1600 = vmatpush1.msra.mxu0 0.0
        %1601 = vmatprep.subr.mxu0 0.0
        %1602 = vmatpush1.msra.mxu0 0.0
        %1603 = vmatprep.subr.mxu0 0.0
        %1604 = vmatpush1.msra.mxu0 0.0
        %1605 = vmatprep.mubr.f32.mxu0 0.0
        %1606 = vmatmul.mubr.f32.gmra.mrb[0].mxu0 %v1530
        %v1607 = vpop.f32.mrb[0].mxu0
        %v1608 = vadd.f32 0.0, %v1607
        %v1609 = vpop.f32.mrb[0].mxu0
        %v1610 = vadd.f32 0.0, %v1609
        %1611 = vmatprep.mubr.f32.mxu0 0.0
        %1612 = vmatmul.mubr.f32.gmra.mrb[0].mxu0 %v1533
        %v1613 = vpop.f32.mrb[0].mxu0
        %v1614 = vadd.f32 0.0, %v1613
        %v1615 = vpop.f32.mrb[0].mxu0
        %v1616 = vadd.f32 0.0, %v1615
        %1617 = vmatprep.mubr.f32.mxu0 0.0
        %1618 = vmatmul.mubr.f32.gmra.mrb[0].mxu0 %v1536
        %v1619 = vpop.f32.mrb[0].mxu0
        %v1620 = vadd.f32 0.0, %v1619
        %v1621 = vpop.f32.mrb[0].mxu0
        %v1622 = vadd.f32 0.0, %v1621
        %1623 = vmatprep.mubr.f32.mxu0 0.0
        %1624 = vmatmul.mubr.f32.gmra.mrb[0].mxu0 %v1539
        %v1625 = vpop.f32.mrb[0].mxu0
        %v1626 = vadd.f32 0.0, %v1625
        %v1627 = vpop.f32.mrb[0].mxu0
        %v1628 = vadd.f32 0.0, %v1627
        %1629 = vdwg.mxu0
        %1630 = vmatprep.subr.mxu0 0.0
        %1631 = vmatpush1.msra.mxu0 %v1507
        %1632 = vmatprep.subr.mxu0 0.0
        %1633 = vmatpush1.msra.mxu0 %v1510
        %1634 = vmatprep.subr.mxu0 0.0
        %1635 = vmatpush1.msra.mxu0 %v1513
        %1636 = vmatprep.subr.mxu0 0.0
        %1637 = vmatpush1.msra.mxu0 %v1516
        %1638 = vmatprep.subr.mxu0 0.0
        %1639 = vmatpush1.msra.mxu0 0.0
        %1640 = vmatprep.subr.mxu0 0.0
        %1641 = vmatpush1.msra.mxu0 0.0
        %1642 = vmatprep.subr.mxu0 0.0
        %1643 = vmatpush1.msra.mxu0 0.0
        %1644 = vmatprep.subr.mxu0 0.0
        %1645 = vmatpush1.msra.mxu0 0.0
        %1646 = vmatprep.subr.mxu0 0.0
        %1647 = vmatpush1.msra.mxu0 0.0
        %1648 = vmatprep.subr.mxu0 0.0
        %1649 = vmatpush1.msra.mxu0 0.0
        %1650 = vmatprep.subr.mxu0 0.0
        %1651 = vmatpush1.msra.mxu0 0.0
        %1652 = vmatprep.subr.mxu0 0.0
        %1653 = vmatpush1.msra.mxu0 0.0
        %1654 = vmatprep.subr.mxu0 0.0
        %1655 = vmatpush1.msra.mxu0 0.0
        %1656 = vmatprep.subr.mxu0 0.0
        %1657 = vmatpush1.msra.mxu0 0.0
        %1658 = vmatprep.subr.mxu0 0.0
        %1659 = vmatpush1.msra.mxu0 0.0
        %1660 = vmatprep.subr.mxu0 0.0
        %1661 = vmatpush1.msra.mxu0 0.0
        %1662 = vmatprep.subr.mxu0 0.0
        %1663 = vmatpush1.msra.mxu0 0.0
        %1664 = vmatprep.subr.mxu0 0.0
        %1665 = vmatpush1.msra.mxu0 0.0
        %1666 = vmatprep.subr.mxu0 0.0
        %1667 = vmatpush1.msra.mxu0 0.0
        %1668 = vmatprep.subr.mxu0 0.0
        %1669 = vmatpush1.msra.mxu0 0.0
        %1670 = vmatprep.subr.mxu0 0.0
        %1671 = vmatpush1.msra.mxu0 0.0
        %1672 = vmatprep.subr.mxu0 0.0
        %1673 = vmatpush1.msra.mxu0 0.0
        %1674 = vmatprep.subr.mxu0 0.0
        %1675 = vmatpush1.msra.mxu0 0.0
        %1676 = vmatprep.subr.mxu0 0.0
        %1677 = vmatpush1.msra.mxu0 0.0
        %1678 = vmatprep.subr.mxu0 0.0
        %1679 = vmatpush1.msra.mxu0 0.0
        %1680 = vmatprep.subr.mxu0 0.0
        %1681 = vmatpush1.msra.mxu0 0.0
        %1682 = vmatprep.subr.mxu0 0.0
        %1683 = vmatpush1.msra.mxu0 0.0
        %1684 = vmatprep.subr.mxu0 0.0
        %1685 = vmatpush1.msra.mxu0 0.0
        %1686 = vmatprep.subr.mxu0 0.0
        %1687 = vmatpush1.msra.mxu0 0.0
        %1688 = vmatprep.subr.mxu0 0.0
        %1689 = vmatpush1.msra.mxu0 0.0
        %1690 = vmatprep.subr.mxu0 0.0
        %1691 = vmatpush1.msra.mxu0 0.0
        %1692 = vmatprep.subr.mxu0 0.0
        %1693 = vmatpush1.msra.mxu0 0.0
        %1694 = vmatprep.mubr.f32.mxu0 0.0
        %1695 = vmatmul.mubr.f32.gmra.mrb[0].mxu0 %v1530
        %v1696 = vpop.f32.mrb[0].mxu0
        %v1697 = vadd.f32 0.0, %v1696
        %v1698 = vpop.f32.mrb[0].mxu0
        %1699 = vmatprep.mubr.f32.mxu0 0.0
        %1700 = vmatmul.mubr.f32.gmra.mrb[0].mxu0 %v1533
        %v1701 = vpop.f32.mrb[0].mxu0
        %v1702 = vadd.f32 0.0, %v1701
        %v1703 = vpop.f32.mrb[0].mxu0
        %1704 = vmatprep.mubr.f32.mxu0 0.0
        %1705 = vmatmul.mubr.f32.gmra.mrb[0].mxu0 %v1536
        %v1706 = vpop.f32.mrb[0].mxu0
        %v1707 = vadd.f32 0.0, %v1706
        %v1708 = vpop.f32.mrb[0].mxu0
        %1709 = vmatprep.mubr.f32.mxu0 0.0
        %1710 = vmatmul.mubr.f32.gmra.mrb[0].mxu0 %v1539
        %v1711 = vpop.f32.mrb[0].mxu0
        %v1712 = vadd.f32 0.0, %v1711
        %v1713 = vpop.f32.mrb[0].mxu0
        %1714 = vdwg.mxu0
        %v1715 = vadd.f32 %v1455, %v1608
        %v1716 = vadd.f32 %v1456, %v1610
        %v1717 = vadd.f32 %v1457, %v1697
        %v1718 = vadd.f32 %v1458, %v1614
        %v1719 = vadd.f32 %v1459, %v1616
        %v1720 = vadd.f32 %v1460, %v1702
        %v1721 = vadd.f32 %v1461, %v1620
        %v1722 = vadd.f32 %v1462, %v1622
        %v1723 = vadd.f32 %v1463, %v1707
        %v1724 = vadd.f32 %v1464, %v1626
        %v1725 = vadd.f32 %v1465, %v1628
        %v1726 = vadd.f32 %v1466, %v1712
        %s1727 = scalar_lea.vmem [#allocation5], 192
        %v1728 = vld [vmem:[%s1727] sm:$0xff]
        %v1729 = vld [vmem:[%s1727 + $0x8] sm:$0xff]
        %v1730 = vld [vmem:[%s1727 + $0x10] sm:$0xff]
        %v1731 = vld [vmem:[%s1727 + $0x18] sm:$0xff]
        %1732 = vrot.lane.b32.xlu0 %v220, 92
        %v1733 = vpop.permute.xlu0 %1732
        %1734 = vrot.lane.b32.xlu0 %v221, 92
        %v1735 = vpop.permute.xlu0 %1734
        %1736 = vrot.lane.b32.xlu0 %v222, 92
        %v1737 = vpop.permute.xlu0 %1736
        %1738 = vrot.lane.b32.xlu0 %v223, 92
        %v1739 = vpop.permute.xlu0 %1738
        %1740 = vrot.lane.b32.xlu0 %v224, 92
        %v1741 = vpop.permute.xlu0 %1740
        %1742 = vrot.lane.b32.xlu0 %v225, 92
        %v1743 = vpop.permute.xlu0 %1742
        %1744 = vrot.lane.b32.xlu0 %v226, 92
        %v1745 = vpop.permute.xlu0 %1744
        %1746 = vrot.lane.b32.xlu0 %v227, 92
        %v1747 = vpop.permute.xlu0 %1746
        %1748 = vrot.lane.b32.xlu0 %v228, 92
        %v1749 = vpop.permute.xlu0 %1748
        %1750 = vrot.lane.b32.xlu0 %v229, 92
        %v1751 = vpop.permute.xlu0 %1750
        %1752 = vrot.lane.b32.xlu0 %v230, 92
        %v1753 = vpop.permute.xlu0 %1752
        %1754 = vrot.lane.b32.xlu0 %v231, 92
        %v1755 = vpop.permute.xlu0 %1754
        %1756 = vrot.lane.b32.xlu0 %v232, 92
        %v1757 = vpop.permute.xlu0 %1756
        %1758 = vrot.lane.b32.xlu0 %v233, 92
        %v1759 = vpop.permute.xlu0 %1758
        %1760 = vrot.lane.b32.xlu0 %v234, 92
        %v1761 = vpop.permute.xlu0 %1760
        %1762 = vrot.lane.b32.xlu0 %v235, 92
        %v1763 = vpop.permute.xlu0 %1762
        %vm1764 = vcmask 752640
        %v1765 = vsel %vm1764, %v1733, %v1735
        %v1766 = vsel %vm1764, %v1735, %v1737
        %v1767 = vsel %vm1764, %v1737, %v1739
        %v1768 = vsel %vm1764, %v1741, %v1743
        %v1769 = vsel %vm1764, %v1743, %v1745
        %v1770 = vsel %vm1764, %v1745, %v1747
        %v1771 = vsel %vm1764, %v1749, %v1751
        %v1772 = vsel %vm1764, %v1751, %v1753
        %v1773 = vsel %vm1764, %v1753, %v1755
        %v1774 = vsel %vm1764, %v1757, %v1759
        %v1775 = vsel %vm1764, %v1759, %v1761
        %v1776 = vsel %vm1764, %v1761, %v1763
        %v1790 = vsel %vm314, %v1728, 0
        %v1793 = vsel %vm314, %v1729, 0
        %v1796 = vsel %vm314, %v1730, 0
        %v1799 = vsel %vm314, %v1731, 0
        %1801 = vmatprep.subr.mxu0 %v1766
        %1802 = vmatpush1.msra.mxu0 %v1765
        %1803 = vmatprep.subr.mxu0 %v1769
        %1804 = vmatpush1.msra.mxu0 %v1768
        %1805 = vmatprep.subr.mxu0 %v1772
        %1806 = vmatpush1.msra.mxu0 %v1771
        %1807 = vmatprep.subr.mxu0 %v1775
        %1808 = vmatpush1.msra.mxu0 %v1774
        %1809 = vmatprep.subr.mxu0 0.0
        %1810 = vmatpush1.msra.mxu0 0.0
        %1811 = vmatprep.subr.mxu0 0.0
        %1812 = vmatpush1.msra.mxu0 0.0
        %1813 = vmatprep.subr.mxu0 0.0
        %1814 = vmatpush1.msra.mxu0 0.0
        %1815 = vmatprep.subr.mxu0 0.0
        %1816 = vmatpush1.msra.mxu0 0.0
        %1817 = vmatprep.subr.mxu0 0.0
        %1818 = vmatpush1.msra.mxu0 0.0
        %1819 = vmatprep.subr.mxu0 0.0
        %1820 = vmatpush1.msra.mxu0 0.0
        %1821 = vmatprep.subr.mxu0 0.0
        %1822 = vmatpush1.msra.mxu0 0.0
        %1823 = vmatprep.subr.mxu0 0.0
        %1824 = vmatpush1.msra.mxu0 0.0
        %1825 = vmatprep.subr.mxu0 0.0
        %1826 = vmatpush1.msra.mxu0 0.0
        %1827 = vmatprep.subr.mxu0 0.0
        %1828 = vmatpush1.msra.mxu0 0.0
        %1829 = vmatprep.subr.mxu0 0.0
        %1830 = vmatpush1.msra.mxu0 0.0
        %1831 = vmatprep.subr.mxu0 0.0
        %1832 = vmatpush1.msra.mxu0 0.0
        %1833 = vmatprep.subr.mxu0 0.0
        %1834 = vmatpush1.msra.mxu0 0.0
        %1835 = vmatprep.subr.mxu0 0.0
        %1836 = vmatpush1.msra.mxu0 0.0
        %1837 = vmatprep.subr.mxu0 0.0
        %1838 = vmatpush1.msra.mxu0 0.0
        %1839 = vmatprep.subr.mxu0 0.0
        %1840 = vmatpush1.msra.mxu0 0.0
        %1841 = vmatprep.subr.mxu0 0.0
        %1842 = vmatpush1.msra.mxu0 0.0
        %1843 = vmatprep.subr.mxu0 0.0
        %1844 = vmatpush1.msra.mxu0 0.0
        %1845 = vmatprep.subr.mxu0 0.0
        %1846 = vmatpush1.msra.mxu0 0.0
        %1847 = vmatprep.subr.mxu0 0.0
        %1848 = vmatpush1.msra.mxu0 0.0
        %1849 = vmatprep.subr.mxu0 0.0
        %1850 = vmatpush1.msra.mxu0 0.0
        %1851 = vmatprep.subr.mxu0 0.0
        %1852 = vmatpush1.msra.mxu0 0.0
        %1853 = vmatprep.subr.mxu0 0.0
        %1854 = vmatpush1.msra.mxu0 0.0
        %1855 = vmatprep.subr.mxu0 0.0
        %1856 = vmatpush1.msra.mxu0 0.0
        %1857 = vmatprep.subr.mxu0 0.0
        %1858 = vmatpush1.msra.mxu0 0.0
        %1859 = vmatprep.subr.mxu0 0.0
        %1860 = vmatpush1.msra.mxu0 0.0
        %1861 = vmatprep.subr.mxu0 0.0
        %1862 = vmatpush1.msra.mxu0 0.0
        %1863 = vmatprep.subr.mxu0 0.0
        %1864 = vmatpush1.msra.mxu0 0.0
        %1865 = vmatprep.mubr.f32.mxu0 0.0
        %1866 = vmatmul.mubr.f32.gmra.mrb[0].mxu0 %v1790
        %v1867 = vpop.f32.mrb[0].mxu0
        %v1868 = vadd.f32 0.0, %v1867
        %v1869 = vpop.f32.mrb[0].mxu0
        %v1870 = vadd.f32 0.0, %v1869
        %1871 = vmatprep.mubr.f32.mxu0 0.0
        %1872 = vmatmul.mubr.f32.gmra.mrb[0].mxu0 %v1793
        %v1873 = vpop.f32.mrb[0].mxu0
        %v1874 = vadd.f32 0.0, %v1873
        %v1875 = vpop.f32.mrb[0].mxu0
        %v1876 = vadd.f32 0.0, %v1875
        %1877 = vmatprep.mubr.f32.mxu0 0.0
        %1878 = vmatmul.mubr.f32.gmra.mrb[0].mxu0 %v1796
        %v1879 = vpop.f32.mrb[0].mxu0
        %v1880 = vadd.f32 0.0, %v1879
        %v1881 = vpop.f32.mrb[0].mxu0
        %v1882 = vadd.f32 0.0, %v1881
        %1883 = vmatprep.mubr.f32.mxu0 0.0
        %1884 = vmatmul.mubr.f32.gmra.mrb[0].mxu0 %v1799
        %v1885 = vpop.f32.mrb[0].mxu0
        %v1886 = vadd.f32 0.0, %v1885
        %v1887 = vpop.f32.mrb[0].mxu0
        %v1888 = vadd.f32 0.0, %v1887
        %1889 = vdwg.mxu0
        %1890 = vmatprep.subr.mxu0 0.0
        %1891 = vmatpush1.msra.mxu0 %v1767
        %1892 = vmatprep.subr.mxu0 0.0
        %1893 = vmatpush1.msra.mxu0 %v1770
        %1894 = vmatprep.subr.mxu0 0.0
        %1895 = vmatpush1.msra.mxu0 %v1773
        %1896 = vmatprep.subr.mxu0 0.0
        %1897 = vmatpush1.msra.mxu0 %v1776
        %1898 = vmatprep.subr.mxu0 0.0
        %1899 = vmatpush1.msra.mxu0 0.0
        %1900 = vmatprep.subr.mxu0 0.0
        %1901 = vmatpush1.msra.mxu0 0.0
        %1902 = vmatprep.subr.mxu0 0.0
        %1903 = vmatpush1.msra.mxu0 0.0
        %1904 = vmatprep.subr.mxu0 0.0
        %1905 = vmatpush1.msra.mxu0 0.0
        %1906 = vmatprep.subr.mxu0 0.0
        %1907 = vmatpush1.msra.mxu0 0.0
        %1908 = vmatprep.subr.mxu0 0.0
        %1909 = vmatpush1.msra.mxu0 0.0
        %1910 = vmatprep.subr.mxu0 0.0
        %1911 = vmatpush1.msra.mxu0 0.0
        %1912 = vmatprep.subr.mxu0 0.0
        %1913 = vmatpush1.msra.mxu0 0.0
        %1914 = vmatprep.subr.mxu0 0.0
        %1915 = vmatpush1.msra.mxu0 0.0
        %1916 = vmatprep.subr.mxu0 0.0
        %1917 = vmatpush1.msra.mxu0 0.0
        %1918 = vmatprep.subr.mxu0 0.0
        %1919 = vmatpush1.msra.mxu0 0.0
        %1920 = vmatprep.subr.mxu0 0.0
        %1921 = vmatpush1.msra.mxu0 0.0
        %1922 = vmatprep.subr.mxu0 0.0
        %1923 = vmatpush1.msra.mxu0 0.0
        %1924 = vmatprep.subr.mxu0 0.0
        %1925 = vmatpush1.msra.mxu0 0.0
        %1926 = vmatprep.subr.mxu0 0.0
        %1927 = vmatpush1.msra.mxu0 0.0
        %1928 = vmatprep.subr.mxu0 0.0
        %1929 = vmatpush1.msra.mxu0 0.0
        %1930 = vmatprep.subr.mxu0 0.0
        %1931 = vmatpush1.msra.mxu0 0.0
        %1932 = vmatprep.subr.mxu0 0.0
        %1933 = vmatpush1.msra.mxu0 0.0
        %1934 = vmatprep.subr.mxu0 0.0
        %1935 = vmatpush1.msra.mxu0 0.0
        %1936 = vmatprep.subr.mxu0 0.0
        %1937 = vmatpush1.msra.mxu0 0.0
        %1938 = vmatprep.subr.mxu0 0.0
        %1939 = vmatpush1.msra.mxu0 0.0
        %1940 = vmatprep.subr.mxu0 0.0
        %1941 = vmatpush1.msra.mxu0 0.0
        %1942 = vmatprep.subr.mxu0 0.0
        %1943 = vmatpush1.msra.mxu0 0.0
        %1944 = vmatprep.subr.mxu0 0.0
        %1945 = vmatpush1.msra.mxu0 0.0
        %1946 = vmatprep.subr.mxu0 0.0
        %1947 = vmatpush1.msra.mxu0 0.0
        %1948 = vmatprep.subr.mxu0 0.0
        %1949 = vmatpush1.msra.mxu0 0.0
        %1950 = vmatprep.subr.mxu0 0.0
        %1951 = vmatpush1.msra.mxu0 0.0
        %1952 = vmatprep.subr.mxu0 0.0
        %1953 = vmatpush1.msra.mxu0 0.0
        %1954 = vmatprep.mubr.f32.mxu0 0.0
        %1955 = vmatmul.mubr.f32.gmra.mrb[0].mxu0 %v1790
        %v1956 = vpop.f32.mrb[0].mxu0
        %v1957 = vadd.f32 0.0, %v1956
        %v1958 = vpop.f32.mrb[0].mxu0
        %1959 = vmatprep.mubr.f32.mxu0 0.0
        %1960 = vmatmul.mubr.f32.gmra.mrb[0].mxu0 %v1793
        %v1961 = vpop.f32.mrb[0].mxu0
        %v1962 = vadd.f32 0.0, %v1961
        %v1963 = vpop.f32.mrb[0].mxu0
        %1964 = vmatprep.mubr.f32.mxu0 0.0
        %1965 = vmatmul.mubr.f32.gmra.mrb[0].mxu0 %v1796
        %v1966 = vpop.f32.mrb[0].mxu0
        %v1967 = vadd.f32 0.0, %v1966
        %v1968 = vpop.f32.mrb[0].mxu0
        %1969 = vmatprep.mubr.f32.mxu0 0.0
        %1970 = vmatmul.mubr.f32.gmra.mrb[0].mxu0 %v1799
        %v1971 = vpop.f32.mrb[0].mxu0
        %v1972 = vadd.f32 0.0, %v1971
        %v1973 = vpop.f32.mrb[0].mxu0
        %1974 = vdwg.mxu0
        %v1975 = vadd.f32 %v1715, %v1868
        %v1976 = vadd.f32 %v1716, %v1870
        %v1977 = vadd.f32 %v1717, %v1957
        %v1978 = vadd.f32 %v1718, %v1874
        %v1979 = vadd.f32 %v1719, %v1876
        %v1980 = vadd.f32 %v1720, %v1962
        %v1981 = vadd.f32 %v1721, %v1880
        %v1982 = vadd.f32 %v1722, %v1882
        %v1983 = vadd.f32 %v1723, %v1967
        %v1984 = vadd.f32 %v1724, %v1886
        %v1985 = vadd.f32 %v1725, %v1888
        %v1986 = vadd.f32 %v1726, %v1972
        %s1987 = scalar_lea.vmem [#allocation5], 224
        %v1988 = vld [vmem:[%s1987] sm:$0xff]
        %v1989 = vld [vmem:[%s1987 + $0x8] sm:$0xff]
        %v1990 = vld [vmem:[%s1987 + $0x10] sm:$0xff]
        %v1991 = vld [vmem:[%s1987 + $0x18] sm:$0xff]
        %1992 = vrot.lane.b32.xlu0 %v220, 91
        %v1993 = vpop.permute.xlu0 %1992
        %1994 = vrot.lane.b32.xlu0 %v221, 91
        %v1995 = vpop.permute.xlu0 %1994
        %1996 = vrot.lane.b32.xlu0 %v222, 91
        %v1997 = vpop.permute.xlu0 %1996
        %1998 = vrot.lane.b32.xlu0 %v223, 91
        %v1999 = vpop.permute.xlu0 %1998
        %2000 = vrot.lane.b32.xlu0 %v224, 91
        %v2001 = vpop.permute.xlu0 %2000
        %2002 = vrot.lane.b32.xlu0 %v225, 91
        %v2003 = vpop.permute.xlu0 %2002
        %2004 = vrot.lane.b32.xlu0 %v226, 91
        %v2005 = vpop.permute.xlu0 %2004
        %2006 = vrot.lane.b32.xlu0 %v227, 91
        %v2007 = vpop.permute.xlu0 %2006
        %2008 = vrot.lane.b32.xlu0 %v228, 91
        %v2009 = vpop.permute.xlu0 %2008
        %2010 = vrot.lane.b32.xlu0 %v229, 91
        %v2011 = vpop.permute.xlu0 %2010
        %2012 = vrot.lane.b32.xlu0 %v230, 91
        %v2013 = vpop.permute.xlu0 %2012
        %2014 = vrot.lane.b32.xlu0 %v231, 91
        %v2015 = vpop.permute.xlu0 %2014
        %2016 = vrot.lane.b32.xlu0 %v232, 91
        %v2017 = vpop.permute.xlu0 %2016
        %2018 = vrot.lane.b32.xlu0 %v233, 91
        %v2019 = vpop.permute.xlu0 %2018
        %2020 = vrot.lane.b32.xlu0 %v234, 91
        %v2021 = vpop.permute.xlu0 %2020
        %2022 = vrot.lane.b32.xlu0 %v235, 91
        %v2023 = vpop.permute.xlu0 %2022
        %vm2024 = vcmask 744448
        %v2025 = vsel %vm2024, %v1993, %v1995
        %v2026 = vsel %vm2024, %v1995, %v1997
        %v2027 = vsel %vm2024, %v1997, %v1999
        %v2028 = vsel %vm2024, %v2001, %v2003
        %v2029 = vsel %vm2024, %v2003, %v2005
        %v2030 = vsel %vm2024, %v2005, %v2007
        %v2031 = vsel %vm2024, %v2009, %v2011
        %v2032 = vsel %vm2024, %v2011, %v2013
        %v2033 = vsel %vm2024, %v2013, %v2015
        %v2034 = vsel %vm2024, %v2017, %v2019
        %v2035 = vsel %vm2024, %v2019, %v2021
        %v2036 = vsel %vm2024, %v2021, %v2023
        %v2050 = vsel %vm314, %v1988, 0
        %v2053 = vsel %vm314, %v1989, 0
        %v2056 = vsel %vm314, %v1990, 0
        %v2059 = vsel %vm314, %v1991, 0
        %2061 = vmatprep.subr.mxu0 %v2026
        %2062 = vmatpush1.msra.mxu0 %v2025
        %2063 = vmatprep.subr.mxu0 %v2029
        %2064 = vmatpush1.msra.mxu0 %v2028
        %2065 = vmatprep.subr.mxu0 %v2032
        %2066 = vmatpush1.msra.mxu0 %v2031
        %2067 = vmatprep.subr.mxu0 %v2035
        %2068 = vmatpush1.msra.mxu0 %v2034
        %2069 = vmatprep.subr.mxu0 0.0
        %2070 = vmatpush1.msra.mxu0 0.0
        %2071 = vmatprep.subr.mxu0 0.0
        %2072 = vmatpush1.msra.mxu0 0.0
        %2073 = vmatprep.subr.mxu0 0.0
        %2074 = vmatpush1.msra.mxu0 0.0
        %2075 = vmatprep.subr.mxu0 0.0
        %2076 = vmatpush1.msra.mxu0 0.0
        %2077 = vmatprep.subr.mxu0 0.0
        %2078 = vmatpush1.msra.mxu0 0.0
        %2079 = vmatprep.subr.mxu0 0.0
        %2080 = vmatpush1.msra.mxu0 0.0
        %2081 = vmatprep.subr.mxu0 0.0
        %2082 = vmatpush1.msra.mxu0 0.0
        %2083 = vmatprep.subr.mxu0 0.0
        %2084 = vmatpush1.msra.mxu0 0.0
        %2085 = vmatprep.subr.mxu0 0.0
        %2086 = vmatpush1.msra.mxu0 0.0
        %2087 = vmatprep.subr.mxu0 0.0
        %2088 = vmatpush1.msra.mxu0 0.0
        %2089 = vmatprep.subr.mxu0 0.0
        %2090 = vmatpush1.msra.mxu0 0.0
        %2091 = vmatprep.subr.mxu0 0.0
        %2092 = vmatpush1.msra.mxu0 0.0
        %2093 = vmatprep.subr.mxu0 0.0
        %2094 = vmatpush1.msra.mxu0 0.0
        %2095 = vmatprep.subr.mxu0 0.0
        %2096 = vmatpush1.msra.mxu0 0.0
        %2097 = vmatprep.subr.mxu0 0.0
        %2098 = vmatpush1.msra.mxu0 0.0
        %2099 = vmatprep.subr.mxu0 0.0
        %2100 = vmatpush1.msra.mxu0 0.0
        %2101 = vmatprep.subr.mxu0 0.0
        %2102 = vmatpush1.msra.mxu0 0.0
        %2103 = vmatprep.subr.mxu0 0.0
        %2104 = vmatpush1.msra.mxu0 0.0
        %2105 = vmatprep.subr.mxu0 0.0
        %2106 = vmatpush1.msra.mxu0 0.0
        %2107 = vmatprep.subr.mxu0 0.0
        %2108 = vmatpush1.msra.mxu0 0.0
        %2109 = vmatprep.subr.mxu0 0.0
        %2110 = vmatpush1.msra.mxu0 0.0
        %2111 = vmatprep.subr.mxu0 0.0
        %2112 = vmatpush1.msra.mxu0 0.0
        %2113 = vmatprep.subr.mxu0 0.0
        %2114 = vmatpush1.msra.mxu0 0.0
        %2115 = vmatprep.subr.mxu0 0.0
        %2116 = vmatpush1.msra.mxu0 0.0
        %2117 = vmatprep.subr.mxu0 0.0
        %2118 = vmatpush1.msra.mxu0 0.0
        %2119 = vmatprep.subr.mxu0 0.0
        %2120 = vmatpush1.msra.mxu0 0.0
        %2121 = vmatprep.subr.mxu0 0.0
        %2122 = vmatpush1.msra.mxu0 0.0
        %2123 = vmatprep.subr.mxu0 0.0
        %2124 = vmatpush1.msra.mxu0 0.0
        %2125 = vmatprep.mubr.f32.mxu0 0.0
        %2126 = vmatmul.mubr.f32.gmra.mrb[0].mxu0 %v2050
        %v2127 = vpop.f32.mrb[0].mxu0
        %v2128 = vadd.f32 0.0, %v2127
        %v2129 = vpop.f32.mrb[0].mxu0
        %v2130 = vadd.f32 0.0, %v2129
        %2131 = vmatprep.mubr.f32.mxu0 0.0
        %2132 = vmatmul.mubr.f32.gmra.mrb[0].mxu0 %v2053
        %v2133 = vpop.f32.mrb[0].mxu0
        %v2134 = vadd.f32 0.0, %v2133
        %v2135 = vpop.f32.mrb[0].mxu0
        %v2136 = vadd.f32 0.0, %v2135
        %2137 = vmatprep.mubr.f32.mxu0 0.0
        %2138 = vmatmul.mubr.f32.gmra.mrb[0].mxu0 %v2056
        %v2139 = vpop.f32.mrb[0].mxu0
        %v2140 = vadd.f32 0.0, %v2139
        %v2141 = vpop.f32.mrb[0].mxu0
        %v2142 = vadd.f32 0.0, %v2141
        %2143 = vmatprep.mubr.f32.mxu0 0.0
        %2144 = vmatmul.mubr.f32.gmra.mrb[0].mxu0 %v2059
        %v2145 = vpop.f32.mrb[0].mxu0
        %v2146 = vadd.f32 0.0, %v2145
        %v2147 = vpop.f32.mrb[0].mxu0
        %v2148 = vadd.f32 0.0, %v2147
        %2149 = vdwg.mxu0
        %2150 = vmatprep.subr.mxu0 0.0
        %2151 = vmatpush1.msra.mxu0 %v2027
        %2152 = vmatprep.subr.mxu0 0.0
        %2153 = vmatpush1.msra.mxu0 %v2030
        %2154 = vmatprep.subr.mxu0 0.0
        %2155 = vmatpush1.msra.mxu0 %v2033
        %2156 = vmatprep.subr.mxu0 0.0
        %2157 = vmatpush1.msra.mxu0 %v2036
        %2158 = vmatprep.subr.mxu0 0.0
        %2159 = vmatpush1.msra.mxu0 0.0
        %2160 = vmatprep.subr.mxu0 0.0
        %2161 = vmatpush1.msra.mxu0 0.0
        %2162 = vmatprep.subr.mxu0 0.0
        %2163 = vmatpush1.msra.mxu0 0.0
        %2164 = vmatprep.subr.mxu0 0.0
        %2165 = vmatpush1.msra.mxu0 0.0
        %2166 = vmatprep.subr.mxu0 0.0
        %2167 = vmatpush1.msra.mxu0 0.0
        %2168 = vmatprep.subr.mxu0 0.0
        %2169 = vmatpush1.msra.mxu0 0.0
        %2170 = vmatprep.subr.mxu0 0.0
        %2171 = vmatpush1.msra.mxu0 0.0
        %2172 = vmatprep.subr.mxu0 0.0
        %2173 = vmatpush1.msra.mxu0 0.0
        %2174 = vmatprep.subr.mxu0 0.0
        %2175 = vmatpush1.msra.mxu0 0.0
        %2176 = vmatprep.subr.mxu0 0.0
        %2177 = vmatpush1.msra.mxu0 0.0
        %2178 = vmatprep.subr.mxu0 0.0
        %2179 = vmatpush1.msra.mxu0 0.0
        %2180 = vmatprep.subr.mxu0 0.0
        %2181 = vmatpush1.msra.mxu0 0.0
        %2182 = vmatprep.subr.mxu0 0.0
        %2183 = vmatpush1.msra.mxu0 0.0
        %2184 = vmatprep.subr.mxu0 0.0
        %2185 = vmatpush1.msra.mxu0 0.0
        %2186 = vmatprep.subr.mxu0 0.0
        %2187 = vmatpush1.msra.mxu0 0.0
        %2188 = vmatprep.subr.mxu0 0.0
        %2189 = vmatpush1.msra.mxu0 0.0
        %2190 = vmatprep.subr.mxu0 0.0
        %2191 = vmatpush1.msra.mxu0 0.0
        %2192 = vmatprep.subr.mxu0 0.0
        %2193 = vmatpush1.msra.mxu0 0.0
        %2194 = vmatprep.subr.mxu0 0.0
        %2195 = vmatpush1.msra.mxu0 0.0
        %2196 = vmatprep.subr.mxu0 0.0
        %2197 = vmatpush1.msra.mxu0 0.0
        %2198 = vmatprep.subr.mxu0 0.0
        %2199 = vmatpush1.msra.mxu0 0.0
        %2200 = vmatprep.subr.mxu0 0.0
        %2201 = vmatpush1.msra.mxu0 0.0
        %2202 = vmatprep.subr.mxu0 0.0
        %2203 = vmatpush1.msra.mxu0 0.0
        %2204 = vmatprep.subr.mxu0 0.0
        %2205 = vmatpush1.msra.mxu0 0.0
        %2206 = vmatprep.subr.mxu0 0.0
        %2207 = vmatpush1.msra.mxu0 0.0
        %2208 = vmatprep.subr.mxu0 0.0
        %2209 = vmatpush1.msra.mxu0 0.0
        %2210 = vmatprep.subr.mxu0 0.0
        %2211 = vmatpush1.msra.mxu0 0.0
        %2212 = vmatprep.subr.mxu0 0.0
        %2213 = vmatpush1.msra.mxu0 0.0
        %2214 = vmatprep.mubr.f32.mxu0 0.0
        %2215 = vmatmul.mubr.f32.gmra.mrb[0].mxu0 %v2050
        %v2216 = vpop.f32.mrb[0].mxu0
        %v2217 = vadd.f32 0.0, %v2216
        %v2218 = vpop.f32.mrb[0].mxu0
        %2219 = vmatprep.mubr.f32.mxu0 0.0
        %2220 = vmatmul.mubr.f32.gmra.mrb[0].mxu0 %v2053
        %v2221 = vpop.f32.mrb[0].mxu0
        %v2222 = vadd.f32 0.0, %v2221
        %v2223 = vpop.f32.mrb[0].mxu0
        %2224 = vmatprep.mubr.f32.mxu0 0.0
        %2225 = vmatmul.mubr.f32.gmra.mrb[0].mxu0 %v2056
        %v2226 = vpop.f32.mrb[0].mxu0
        %v2227 = vadd.f32 0.0, %v2226
        %v2228 = vpop.f32.mrb[0].mxu0
        %2229 = vmatprep.mubr.f32.mxu0 0.0
        %2230 = vmatmul.mubr.f32.gmra.mrb[0].mxu0 %v2059
        %v2231 = vpop.f32.mrb[0].mxu0
        %v2232 = vadd.f32 0.0, %v2231
        %v2233 = vpop.f32.mrb[0].mxu0
        %2234 = vdwg.mxu0
        %v2235 = vadd.f32 %v1975, %v2128
        %v2236 = vadd.f32 %v1976, %v2130
        %v2237 = vadd.f32 %v1977, %v2217
        %v2238 = vadd.f32 %v1978, %v2134
        %v2239 = vadd.f32 %v1979, %v2136
        %v2240 = vadd.f32 %v1980, %v2222
        %v2241 = vadd.f32 %v1981, %v2140
        %v2242 = vadd.f32 %v1982, %v2142
        %v2243 = vadd.f32 %v1983, %v2227
        %v2244 = vadd.f32 %v1984, %v2146
        %v2245 = vadd.f32 %v1985, %v2148
        %v2246 = vadd.f32 %v1986, %v2232
        %s2247 = scalar_lea.vmem [#allocation5], 256
        %v2248 = vld [vmem:[%s2247] sm:$0xff]
        %v2249 = vld [vmem:[%s2247 + $0x8] sm:$0xff]
        %v2250 = vld [vmem:[%s2247 + $0x10] sm:$0xff]
        %v2251 = vld [vmem:[%s2247 + $0x18] sm:$0xff]
        %2252 = vrot.lane.b32.xlu0 %v220, 90
        %v2253 = vpop.permute.xlu0 %2252
        %2254 = vrot.lane.b32.xlu0 %v221, 90
        %v2255 = vpop.permute.xlu0 %2254
        %2256 = vrot.lane.b32.xlu0 %v222, 90
        %v2257 = vpop.permute.xlu0 %2256
        %2258 = vrot.lane.b32.xlu0 %v223, 90
        %v2259 = vpop.permute.xlu0 %2258
        %2260 = vrot.lane.b32.xlu0 %v224, 90
        %v2261 = vpop.permute.xlu0 %2260
        %2262 = vrot.lane.b32.xlu0 %v225, 90
        %v2263 = vpop.permute.xlu0 %2262
        %2264 = vrot.lane.b32.xlu0 %v226, 90
        %v2265 = vpop.permute.xlu0 %2264
        %2266 = vrot.lane.b32.xlu0 %v227, 90
        %v2267 = vpop.permute.xlu0 %2266
        %2268 = vrot.lane.b32.xlu0 %v228, 90
        %v2269 = vpop.permute.xlu0 %2268
        %2270 = vrot.lane.b32.xlu0 %v229, 90
        %v2271 = vpop.permute.xlu0 %2270
        %2272 = vrot.lane.b32.xlu0 %v230, 90
        %v2273 = vpop.permute.xlu0 %2272
        %2274 = vrot.lane.b32.xlu0 %v231, 90
        %v2275 = vpop.permute.xlu0 %2274
        %2276 = vrot.lane.b32.xlu0 %v232, 90
        %v2277 = vpop.permute.xlu0 %2276
        %2278 = vrot.lane.b32.xlu0 %v233, 90
        %v2279 = vpop.permute.xlu0 %2278
        %2280 = vrot.lane.b32.xlu0 %v234, 90
        %v2281 = vpop.permute.xlu0 %2280
        %2282 = vrot.lane.b32.xlu0 %v235, 90
        %v2283 = vpop.permute.xlu0 %2282
        %vm2284 = vcmask 736256
        %v2285 = vsel %vm2284, %v2253, %v2255
        %v2286 = vsel %vm2284, %v2255, %v2257
        %v2287 = vsel %vm2284, %v2257, %v2259
        %v2288 = vsel %vm2284, %v2261, %v2263
        %v2289 = vsel %vm2284, %v2263, %v2265
        %v2290 = vsel %vm2284, %v2265, %v2267
        %v2291 = vsel %vm2284, %v2269, %v2271
        %v2292 = vsel %vm2284, %v2271, %v2273
        %v2293 = vsel %vm2284, %v2273, %v2275
        %v2294 = vsel %vm2284, %v2277, %v2279
        %v2295 = vsel %vm2284, %v2279, %v2281
        %v2296 = vsel %vm2284, %v2281, %v2283
        %v2310 = vsel %vm314, %v2248, 0
        %v2313 = vsel %vm314, %v2249, 0
        %v2316 = vsel %vm314, %v2250, 0
        %v2319 = vsel %vm314, %v2251, 0
        %2321 = vmatprep.subr.mxu0 %v2286
        %2322 = vmatpush1.msra.mxu0 %v2285
        %2323 = vmatprep.subr.mxu0 %v2289
        %2324 = vmatpush1.msra.mxu0 %v2288
        %2325 = vmatprep.subr.mxu0 %v2292
        %2326 = vmatpush1.msra.mxu0 %v2291
        %2327 = vmatprep.subr.mxu0 %v2295
        %2328 = vmatpush1.msra.mxu0 %v2294
        %2329 = vmatprep.subr.mxu0 0.0
        %2330 = vmatpush1.msra.mxu0 0.0
        %2331 = vmatprep.subr.mxu0 0.0
        %2332 = vmatpush1.msra.mxu0 0.0
        %2333 = vmatprep.subr.mxu0 0.0
        %2334 = vmatpush1.msra.mxu0 0.0
        %2335 = vmatprep.subr.mxu0 0.0
        %2336 = vmatpush1.msra.mxu0 0.0
        %2337 = vmatprep.subr.mxu0 0.0
        %2338 = vmatpush1.msra.mxu0 0.0
        %2339 = vmatprep.subr.mxu0 0.0
        %2340 = vmatpush1.msra.mxu0 0.0
        %2341 = vmatprep.subr.mxu0 0.0
        %2342 = vmatpush1.msra.mxu0 0.0
        %2343 = vmatprep.subr.mxu0 0.0
        %2344 = vmatpush1.msra.mxu0 0.0
        %2345 = vmatprep.subr.mxu0 0.0
        %2346 = vmatpush1.msra.mxu0 0.0
        %2347 = vmatprep.subr.mxu0 0.0
        %2348 = vmatpush1.msra.mxu0 0.0
        %2349 = vmatprep.subr.mxu0 0.0
        %2350 = vmatpush1.msra.mxu0 0.0
        %2351 = vmatprep.subr.mxu0 0.0
        %2352 = vmatpush1.msra.mxu0 0.0
        %2353 = vmatprep.subr.mxu0 0.0
        %2354 = vmatpush1.msra.mxu0 0.0
        %2355 = vmatprep.subr.mxu0 0.0
        %2356 = vmatpush1.msra.mxu0 0.0
        %2357 = vmatprep.subr.mxu0 0.0
        %2358 = vmatpush1.msra.mxu0 0.0
        %2359 = vmatprep.subr.mxu0 0.0
        %2360 = vmatpush1.msra.mxu0 0.0
        %2361 = vmatprep.subr.mxu0 0.0
        %2362 = vmatpush1.msra.mxu0 0.0
        %2363 = vmatprep.subr.mxu0 0.0
        %2364 = vmatpush1.msra.mxu0 0.0
        %2365 = vmatprep.subr.mxu0 0.0
        %2366 = vmatpush1.msra.mxu0 0.0
        %2367 = vmatprep.subr.mxu0 0.0
        %2368 = vmatpush1.msra.mxu0 0.0
        %2369 = vmatprep.subr.mxu0 0.0
        %2370 = vmatpush1.msra.mxu0 0.0
        %2371 = vmatprep.subr.mxu0 0.0
        %2372 = vmatpush1.msra.mxu0 0.0
        %2373 = vmatprep.subr.mxu0 0.0
        %2374 = vmatpush1.msra.mxu0 0.0
        %2375 = vmatprep.subr.mxu0 0.0
        %2376 = vmatpush1.msra.mxu0 0.0
        %2377 = vmatprep.subr.mxu0 0.0
        %2378 = vmatpush1.msra.mxu0 0.0
        %2379 = vmatprep.subr.mxu0 0.0
        %2380 = vmatpush1.msra.mxu0 0.0
        %2381 = vmatprep.subr.mxu0 0.0
        %2382 = vmatpush1.msra.mxu0 0.0
        %2383 = vmatprep.subr.mxu0 0.0
        %2384 = vmatpush1.msra.mxu0 0.0
        %2385 = vmatprep.mubr.f32.mxu0 0.0
        %2386 = vmatmul.mubr.f32.gmra.mrb[0].mxu0 %v2310
        %v2387 = vpop.f32.mrb[0].mxu0
        %v2388 = vadd.f32 0.0, %v2387
        %v2389 = vpop.f32.mrb[0].mxu0
        %v2390 = vadd.f32 0.0, %v2389
        %2391 = vmatprep.mubr.f32.mxu0 0.0
        %2392 = vmatmul.mubr.f32.gmra.mrb[0].mxu0 %v2313
        %v2393 = vpop.f32.mrb[0].mxu0
        %v2394 = vadd.f32 0.0, %v2393
        %v2395 = vpop.f32.mrb[0].mxu0
        %v2396 = vadd.f32 0.0, %v2395
        %2397 = vmatprep.mubr.f32.mxu0 0.0
        %2398 = vmatmul.mubr.f32.gmra.mrb[0].mxu0 %v2316
        %v2399 = vpop.f32.mrb[0].mxu0
        %v2400 = vadd.f32 0.0, %v2399
        %v2401 = vpop.f32.mrb[0].mxu0
        %v2402 = vadd.f32 0.0, %v2401
        %2403 = vmatprep.mubr.f32.mxu0 0.0
        %2404 = vmatmul.mubr.f32.gmra.mrb[0].mxu0 %v2319
        %v2405 = vpop.f32.mrb[0].mxu0
        %v2406 = vadd.f32 0.0, %v2405
        %v2407 = vpop.f32.mrb[0].mxu0
        %v2408 = vadd.f32 0.0, %v2407
        %2409 = vdwg.mxu0
        %2410 = vmatprep.subr.mxu0 0.0
        %2411 = vmatpush1.msra.mxu0 %v2287
        %2412 = vmatprep.subr.mxu0 0.0
        %2413 = vmatpush1.msra.mxu0 %v2290
        %2414 = vmatprep.subr.mxu0 0.0
        %2415 = vmatpush1.msra.mxu0 %v2293
        %2416 = vmatprep.subr.mxu0 0.0
        %2417 = vmatpush1.msra.mxu0 %v2296
        %2418 = vmatprep.subr.mxu0 0.0
        %2419 = vmatpush1.msra.mxu0 0.0
        %2420 = vmatprep.subr.mxu0 0.0
        %2421 = vmatpush1.msra.mxu0 0.0
        %2422 = vmatprep.subr.mxu0 0.0
        %2423 = vmatpush1.msra.mxu0 0.0
        %2424 = vmatprep.subr.mxu0 0.0
        %2425 = vmatpush1.msra.mxu0 0.0
        %2426 = vmatprep.subr.mxu0 0.0
        %2427 = vmatpush1.msra.mxu0 0.0
        %2428 = vmatprep.subr.mxu0 0.0
        %2429 = vmatpush1.msra.mxu0 0.0
        %2430 = vmatprep.subr.mxu0 0.0
        %2431 = vmatpush1.msra.mxu0 0.0
        %2432 = vmatprep.subr.mxu0 0.0
        %2433 = vmatpush1.msra.mxu0 0.0
        %2434 = vmatprep.subr.mxu0 0.0
        %2435 = vmatpush1.msra.mxu0 0.0
        %2436 = vmatprep.subr.mxu0 0.0
        %2437 = vmatpush1.msra.mxu0 0.0
        %2438 = vmatprep.subr.mxu0 0.0
        %2439 = vmatpush1.msra.mxu0 0.0
        %2440 = vmatprep.subr.mxu0 0.0
        %2441 = vmatpush1.msra.mxu0 0.0
        %2442 = vmatprep.subr.mxu0 0.0
        %2443 = vmatpush1.msra.mxu0 0.0
        %2444 = vmatprep.subr.mxu0 0.0
        %2445 = vmatpush1.msra.mxu0 0.0
        %2446 = vmatprep.subr.mxu0 0.0
        %2447 = vmatpush1.msra.mxu0 0.0
        %2448 = vmatprep.subr.mxu0 0.0
        %2449 = vmatpush1.msra.mxu0 0.0
        %2450 = vmatprep.subr.mxu0 0.0
        %2451 = vmatpush1.msra.mxu0 0.0
        %2452 = vmatprep.subr.mxu0 0.0
        %2453 = vmatpush1.msra.mxu0 0.0
        %2454 = vmatprep.subr.mxu0 0.0
        %2455 = vmatpush1.msra.mxu0 0.0
        %2456 = vmatprep.subr.mxu0 0.0
        %2457 = vmatpush1.msra.mxu0 0.0
        %2458 = vmatprep.subr.mxu0 0.0
        %2459 = vmatpush1.msra.mxu0 0.0
        %2460 = vmatprep.subr.mxu0 0.0
        %2461 = vmatpush1.msra.mxu0 0.0
        %2462 = vmatprep.subr.mxu0 0.0
        %2463 = vmatpush1.msra.mxu0 0.0
        %2464 = vmatprep.subr.mxu0 0.0
        %2465 = vmatpush1.msra.mxu0 0.0
        %2466 = vmatprep.subr.mxu0 0.0
        %2467 = vmatpush1.msra.mxu0 0.0
        %2468 = vmatprep.subr.mxu0 0.0
        %2469 = vmatpush1.msra.mxu0 0.0
        %2470 = vmatprep.subr.mxu0 0.0
        %2471 = vmatpush1.msra.mxu0 0.0
        %2472 = vmatprep.subr.mxu0 0.0
        %2473 = vmatpush1.msra.mxu0 0.0
        %2474 = vmatprep.mubr.f32.mxu0 0.0
        %2475 = vmatmul.mubr.f32.gmra.mrb[0].mxu0 %v2310
        %v2476 = vpop.f32.mrb[0].mxu0
        %v2477 = vadd.f32 0.0, %v2476
        %v2478 = vpop.f32.mrb[0].mxu0
        %2479 = vmatprep.mubr.f32.mxu0 0.0
        %2480 = vmatmul.mubr.f32.gmra.mrb[0].mxu0 %v2313
        %v2481 = vpop.f32.mrb[0].mxu0
        %v2482 = vadd.f32 0.0, %v2481
        %v2483 = vpop.f32.mrb[0].mxu0
        %2484 = vmatprep.mubr.f32.mxu0 0.0
        %2485 = vmatmul.mubr.f32.gmra.mrb[0].mxu0 %v2316
        %v2486 = vpop.f32.mrb[0].mxu0
        %v2487 = vadd.f32 0.0, %v2486
        %v2488 = vpop.f32.mrb[0].mxu0
        %2489 = vmatprep.mubr.f32.mxu0 0.0
        %2490 = vmatmul.mubr.f32.gmra.mrb[0].mxu0 %v2319
        %v2491 = vpop.f32.mrb[0].mxu0
        %v2492 = vadd.f32 0.0, %v2491
        %v2493 = vpop.f32.mrb[0].mxu0
        %2494 = vdwg.mxu0
        %v2495 = vadd.f32 %v2235, %v2388
        %v2496 = vadd.f32 %v2236, %v2390
        %v2497 = vadd.f32 %v2237, %v2477
        %v2498 = vadd.f32 %v2238, %v2394
        %v2499 = vadd.f32 %v2239, %v2396
        %v2500 = vadd.f32 %v2240, %v2482
        %v2501 = vadd.f32 %v2241, %v2400
        %v2502 = vadd.f32 %v2242, %v2402
        %v2503 = vadd.f32 %v2243, %v2487
        %v2504 = vadd.f32 %v2244, %v2406
        %v2505 = vadd.f32 %v2245, %v2408
        %v2506 = vadd.f32 %v2246, %v2492
        %v2507 = vld [vmem:[%s2] sm:$0xff]
        %v2508 = vld [vmem:[%s2 + $0x8] sm:$0xff]
        %v2509 = vld [vmem:[%s2 + $0x10] sm:$0xff]
        %v2510 = vld [vmem:[%s2 + $0x18] sm:$0xff]
        %2512 = vset.pattern.permute.xlu0 0
        %2513 = vperm.xlu0 %2512, %v2507
        %v2514 = vpop.permute.xlu0 %2513
        %2517 = vset.pattern.permute.xlu0 0
        %2518 = vperm.xlu0 %2517, %v2508
        %v2519 = vpop.permute.xlu0 %2518
        %2522 = vset.pattern.permute.xlu0 0
        %2523 = vperm.xlu0 %2522, %v2509
        %v2524 = vpop.permute.xlu0 %2523
        %2527 = vset.pattern.permute.xlu0 0
        %2528 = vperm.xlu0 %2527, %v2510
        %v2529 = vpop.permute.xlu0 %2528
        %v2531 = vadd.f32 %v2495, %v2514
        %v2532 = vadd.f32 %v2496, %v2514
        %v2533 = vadd.f32 %v2497, %v2514
        %v2534 = vadd.f32 %v2498, %v2519
        %v2535 = vadd.f32 %v2499, %v2519
        %v2536 = vadd.f32 %v2500, %v2519
        %v2537 = vadd.f32 %v2501, %v2524
        %v2538 = vadd.f32 %v2502, %v2524
        %v2539 = vadd.f32 %v2503, %v2524
        %v2540 = vadd.f32 %v2504, %v2529
        %v2541 = vadd.f32 %v2505, %v2529
        %v2542 = vadd.f32 %v2506, %v2529
        %v2543 = vmax.f32 %v2531, 0.0
        %v2544 = vmax.f32 %v2532, 0.0
        %v2545 = vmax.f32 %v2533, 0.0
        %v2546 = vmax.f32 %v2534, 0.0
        %v2547 = vmax.f32 %v2535, 0.0
        %v2548 = vmax.f32 %v2536, 0.0
        %v2549 = vmax.f32 %v2537, 0.0
        %v2550 = vmax.f32 %v2538, 0.0
        %v2551 = vmax.f32 %v2539, 0.0
        %v2552 = vmax.f32 %v2540, 0.0
        %v2553 = vmax.f32 %v2541, 0.0
        %v2554 = vmax.f32 %v2542, 0.0
        %2555 = vst [vmem:[%s203] sm:$0xff] %v2543
        %2556 = vst [vmem:[%s203 + $0x8] sm:$0xff] %v2544
        %2557 = vst [vmem:[%s203 + $0x10] sm:$0xff] %v2545
        %2558 = vst [vmem:[%s203 + $0x18] sm:$0xff] %v2546
        %2559 = vst [vmem:[%s203 + $0x20] sm:$0xff] %v2547
        %2560 = vst [vmem:[%s203 + $0x28] sm:$0xff] %v2548
        %2561 = vst [vmem:[%s203 + $0x30] sm:$0xff] %v2549
        %2562 = vst [vmem:[%s203 + $0x38] sm:$0xff] %v2550
        %2563 = vst [vmem:[%s203 + $0x40] sm:$0xff] %v2551
        %2564 = vst [vmem:[%s203 + $0x48] sm:$0xff] %v2552
        %2565 = vst [vmem:[%s203 + $0x50] sm:$0xff] %v2553
        %2566 = vst [vmem:[%s203 + $0x58] sm:$0xff] %v2554
        %s2567 = sand.u32 %s97, 1
        %s2568 = scalar_lea.sflag [#allocation4], %s2567
        %s2569 = sand.u32 %s97, 1
        %s2570 = smul.addr %s2569, 96
        %s2571 = scalar_lea.vmem [#allocation7], %s2570
        // Predicated region
        $region41: #{tpu_custom_call.1} parent=31 // pred_check
          %p2572 = pneg %p107
        $region42: #{tpu_custom_call.1} parent=31 // pred_check_branch
          %2574 = sbr.rel (%p2572) target = $region44
        $region43: #{tpu_custom_call.1} parent=31 // pred_region
          %s2576 = ssub.s32 1536, 1536
          %2577 = vsyncadd %s2568, %s2576
          %s2578 = smul.addr %s21, 12
          %s2579 = smul.addr %s2578, 128
          %s2580 = scalar_lea.hbm %s3, %s2579
          %s2581 = sshll.u32 %s2571, 4
          %s2582 = int_to_ptr.vmem [resolvable:$true] %s2581
          %2587 = dma.vmem_to_hbm [thread:$0]  %s2582, 1536, %s2580, %s2568, 384, 384, 24
        $region44: #{tpu_custom_call.1} parent=31 // pred_fallthru
          _
      $region32: #{tpu_custom_call.1} parent=5 // pred_fallthru
        _
      %p2588 = scmp.le.s32.totalorder 2, %s16
      // Predicated region
      $region45: #{tpu_custom_call.1} parent=5 // pred_check
        %p2589 = pneg %p2588
      $region46: #{tpu_custom_call.1} parent=5 // pred_check_branch
        %2591 = sbr.rel (%p2589) target = $region48
      $region47: #{tpu_custom_call.1} parent=5 // pred_region
        %s2592 = ssub.s32 %s16, 2
        // Predicated region
        $region49: #{tpu_custom_call.1} parent=47 // pred_check
          %p2593 = pneg %p113
        $region50: #{tpu_custom_call.1} parent=47 // pred_check_branch
          %2595 = sbr.rel (%p2593) target = $region52
        $region51: #{tpu_custom_call.1} parent=47 // pred_region
          %s2596 = sand.u32 %s98, 1
          %s2597 = scalar_lea.sflag [#allocation4], %s2596
          %s2598 = sand.u32 %s98, 1
          %s2599 = smul.addr %s2598, 96
          %s2600 = scalar_lea.vmem [#allocation7], %s2599
          %2601 = dma.done %s2597, 1536
        $region52: #{tpu_custom_call.1} parent=47 // pred_fallthru
          _
      $region48: #{tpu_custom_call.1} parent=5 // pred_fallthru
        _
    $region6: #{tpu_custom_call.1} parent=1 // loop_footer
      %s20 = sadd.s32 1, %s16
    $region7: #{tpu_custom_call.1} parent=1 // loop_footer_branch
      %15 = sbr.rel target = $region3
    $region8: #{tpu_custom_call.1} parent=1 // loop_exit
      _
    %2602 = vsyncpa [#allocation3], 1
    %s2603 = scalar_lea.sflag [#allocation3], 1
    %2604 = vsyncpa %s2603, 1
    %2605 = vsyncpa [#allocation6], 1
    %2606 = vsyncpa [#allocation4], 1
    %s2607 = scalar_lea.sflag [#allocation4], 1
    %2608 = vsyncpa %s2607, 1

</llo_original>
